<compile_context>
chip_gen: v5e
topology: v5e:2x2
jax: 0.10.0
libtpu: 0.0.40
codegen_flags: <defaults>
</compile_context>

<pallas_src>
import numpy as np
import jax
import jax.numpy as jnp
from jax.experimental import pallas as pl
from jax.experimental.pallas import tpu as pltpu

VMEM = pltpu.MemorySpace.VMEM
F32 = jnp.float32


# ------------------------------------------------------------------ kernel --

def lenet_kernel(x_ref, band1_ref, band2_ref, sw1_ref, e1_ref, e0_ref,
                 bias_ref, w23_ref, out_ref):
    """Whole LeNet forward; batch stacked along rows; everything in VMEM.

    x_ref   : (B*32, 32)    images, sample b at rows b*32 .. b*32+31
    band1   : (5, 32, 168)  conv1 band matrices        [kh, w_in, co*28 + ow]
    band2   : (5, 168, 160) conv2 bands, pool1 column-selection folded in
                            [kh, ci*28 + 2*j, co*10 + ow]
    sw1     : (5, 160, 120) fc1 weights, pool2 column-selection + flatten
                            folded in                   [i, co*10 + 2*j, n]
    e1      : (B*16, B*32)  pool1 row selector: [b*16+i, b*32+2i] = 1 (i < 14)
    e0      : (B,    B*16)  final row selector: [b, b*16] = 1
    bias    : (5, 256)      rows: conv1, conv2, fc1, fc2, fc3 (lane padded)
    w23     : (204, 128)    rows 0:120 cols 0:84 = fc2_w.T
                            rows 120:204 cols 0:10 = fc3_w.T
    out     : (B, 10)
    """

    def up(v, k):
        # rows shifted toward index 0 by k: result[r, :] = v[(r + k) % n, :]
        return pltpu.roll(v, v.shape[0] - k, axis=0) if k else v

    def left1(v):
        # cols shifted toward index 0 by 1: result[:, c] = v[:, (c + 1) % n]
        return pltpu.roll(v, v.shape[1] - 1, axis=1)

    x = x_ref[...]                                             # (B*32, 32)

    # ---- conv1 + bias + ReLU -> (B*32, 168); rows b*32 + (0..27) valid -----
    acc1 = jnp.dot(x, band1_ref[0], preferred_element_type=F32)
    for kh in range(1, 5):
        acc1 = acc1 + jnp.dot(up(x, kh), band1_ref[kh],
                              preferred_element_type=F32)
    y1 = jnp.maximum(acc1 + bias_ref[0:1, 0:168], 0.0)

    # ---- 2x2 max-pool #1: pairwise max via rolls, row subsample via e1 -----
    zc1 = jnp.maximum(y1, left1(y1))
    zr1 = jnp.maximum(zc1, up(zc1, 1))
    p1 = jnp.dot(e1_ref[...], zr1, preferred_element_type=F32)  # (B*16, 168)

    # ---- conv2 + bias + ReLU -> (B*16, 160); rows b*16 + (0..9) valid ------
    acc2 = jnp.dot(p1, band2_ref[0], preferred_element_type=F32)
    for kh in range(1, 5):
        acc2 = acc2 + jnp.dot(up(p1, kh), band2_ref[kh],
                              preferred_element_type=F32)
    y2 = jnp.maximum(acc2 + bias_ref[1:2, 0:160], 0.0)

    # ---- 2x2 max-pool #2 (row subsample is absorbed by the fc1 rolls) ------
    zc2 = jnp.maximum(y2, left1(y2))
    zr2 = jnp.maximum(zc2, up(zc2, 1))                          # (B*16, 160)

    # ---- fc1 (pool2 col-select + flatten folded into sw1), M = B*16 rows ---
    h1 = jnp.dot(zr2, sw1_ref[0], preferred_element_type=F32)
    for i in range(1, 5):
        h1 = h1 + jnp.dot(up(zr2, 2 * i), sw1_ref[i],
                          preferred_element_type=F32)
    h1 = jnp.maximum(h1 + bias_ref[2:3, 0:120], 0.0)            # ReLU -> fc2

    # ---- fc2 -> ReLU -> fc3 (still at M = B*16; same MXU cost as M = B) ----
    h2 = jnp.dot(h1, w23_ref[0:120, 0:84], preferred_element_type=F32)
    h2 = jnp.maximum(h2 + bias_ref[3:4, 0:84], 0.0)             # ReLU -> fc3
    h3 = jnp.dot(h2, w23_ref[120:204, 0:10], preferred_element_type=F32)
    h3 = h3 + bias_ref[4:5, 0:10]

    # ---- pick row b*16 of each sample block ---------------------------------
    out_ref[...] = jnp.dot(e0_ref[...], h3, preferred_element_type=F32)


# ------------------------------------------------- one-time weight prepack --

def _conv_band(w, w_in, w_out):
    """(Cout,Cin,KH,KW) -> (KH, Cin*W_in, Cout*W_out) band matrices so that
    conv output row r == sum over kh of input_row(r+kh) @ band[kh]."""
    cout, cin, kh, kw = w.shape
    t = (np.arange(w_in)[None, :, None]
         == (np.arange(w_out)[None, None, :] + np.arange(kw)[:, None, None])
         ).astype(np.float32)                                  # (KW, W_in, W_out)
    band = jnp.einsum("oihk,kwv->hiwov", w.astype(F32), jnp.asarray(t))
    return band.reshape(kh, cin * w_in, cout * w_out)


def _pool_col_selector(channels, w_out, w_in):
    """0/1 matrix (channels*w_in, channels*w_out) selecting even columns inside
    each channel block (the column half of a 2x2 max-pool)."""
    sel = np.zeros((channels * w_in, channels * w_out), np.float32)
    m = np.arange(channels * w_out)
    sel[w_in * (m // w_out) + 2 * (m % w_out), m] = 1.0
    return jnp.asarray(sel)


def prepare_params(p, batch):
    """All weight layout / folding work happens here, ONCE, off the hot path."""
    band1 = _conv_band(p["conv1_w"], 32, 28)                    # (5, 32, 168)
    band2 = _conv_band(p["conv2_w"], 14, 10)                    # (5, 84, 160)
    s1 = _pool_col_selector(6, 14, 28)                          # (168, 84)
    s2 = _pool_col_selector(16, 5, 10)                          # (160, 80)
    band2s = jnp.einsum("cs,ksn->kcn", s1, band2)               # (5, 168, 160)

    fc1_w4 = p["fc1_w"].reshape(120, 16, 5, 5)
    # w1r[i, co*5 + j, n] = fc1_w[n, co*25 + i*5 + j]  (flatten folded in)
    w1r = jnp.transpose(fc1_w4, (2, 1, 3, 0)).reshape(5, 80, 120)
    sw1 = jnp.einsum("cs,ksn->kcn", s2, w1r)                    # (5, 160, 120)

    e1 = np.zeros((batch * 16, batch * 32), np.float32)
    e0 = np.zeros((batch, batch * 16), np.float32)
    idx = np.arange(14)
    for b in range(batch):
        e1[b * 16 + idx, b * 32 + 2 * idx] = 1.0
        e0[b, b * 16] = 1.0

    biases = jnp.zeros((5, 256), F32)
    biases = biases.at[0, 0:168].set(jnp.repeat(p["conv1_b"].astype(F32), 28))
    biases = biases.at[1, 0:160].set(jnp.repeat(p["conv2_b"].astype(F32), 10))
    biases = biases.at[2, 0:120].set(p["fc1_b"].astype(F32))
    biases = biases.at[3, 0:84].set(p["fc2_b"].astype(F32))
    biases = biases.at[4, 0:10].set(p["fc3_b"].astype(F32))

    w23 = jnp.zeros((204, 128), F32)
    w23 = w23.at[0:120, 0:84].set(p["fc2_w"].T.astype(F32))
    w23 = w23.at[120:204, 0:10].set(p["fc3_w"].T.astype(F32))

    return {
        "band1": band1, "band2": band2s, "sw1": sw1,
        "e1": jnp.asarray(e1), "e0": jnp.asarray(e0),
        "biases": biases, "w23": w23,
    }


# ------------------------------------------------------------------ wrapper --

@jax.jit
def lenet_forward(x, prep):
    B = x.shape[0]
    x2d = x.astype(F32).reshape(B * 32, 32)   # stack batch along sublanes (free)
    vspec = pl.BlockSpec(memory_space=VMEM)
    args = (x2d, prep["band1"], prep["band2"], prep["sw1"],
            prep["e1"], prep["e0"], prep["biases"], prep["w23"])
    return pl.pallas_call(
        lenet_kernel,
        out_shape=jax.ShapeDtypeStruct((B, 10), F32),
        in_specs=[vspec] * len(args),
        out_specs=vspec,
    )(*args)


# ---------------------------------------------------- pure-JAX reference ----

def lenet_reference(x, p):
    def conv(x, w, b):
        y = jax.lax.conv_general_dilated(
            x, w, (1, 1), "VALID",
            dimension_numbers=("NCHW", "OIHW", "NCHW"))
        return jnp.maximum(y + b.reshape(1, -1, 1, 1), 0.0)

    def pool(x):
        return jax.lax.reduce_window(x, -jnp.inf, jax.lax.max,
                                     (1, 1, 2, 2), (1, 1, 2, 2), "VALID")

    y = pool(conv(x, p["conv1_w"], p["conv1_b"]))
    y = pool(conv(y, p["conv2_w"], p["conv2_b"]))
    f = y.reshape(y.shape[0], -1)
    h1 = f @ p["fc1_w"].T + p["fc1_b"]
    h2 = jnp.maximum(h1, 0.0) @ p["fc2_w"].T + p["fc2_b"]
    return jnp.maximum(h2, 0.0) @ p["fc3_w"].T + p["fc3_b"]


# -------------------------------------------------------------------- main --

if __name__ == "__main__":
    key = jax.random.PRNGKey(0)
    ks = jax.random.split(key, 11)

    # LeNet needs 32x32 single-channel input so flatten yields 16*5*5 = 400.
    x = jax.random.normal(ks[0], (2, 1, 32, 32), F32)

    params = {
        "conv1_w": 0.1 * jax.random.normal(ks[1], (6, 1, 5, 5), F32),
        "conv1_b": 0.1 * jax.random.normal(ks[2], (6,), F32),
        "conv2_w": 0.1 * jax.random.normal(ks[3], (16, 6, 5, 5), F32),
        "conv2_b": 0.1 * jax.random.normal(ks[4], (16,), F32),
        "fc1_w": 0.05 * jax.random.normal(ks[5], (120, 400), F32),
        "fc1_b": 0.05 * jax.random.normal(ks[6], (120,), F32),
        "fc2_w": 0.05 * jax.random.normal(ks[7], (84, 120), F32),
        "fc2_b": 0.05 * jax.random.normal(ks[8], (84,), F32),
        "fc3_w": 0.05 * jax.random.normal(ks[9], (10, 84), F32),
        "fc3_b": 0.05 * jax.random.normal(ks[10], (10,), F32),
    }

    prep = prepare_params(params, batch=x.shape[0])   # one-time layout work
    prep = jax.tree_util.tree_map(jax.block_until_ready, prep)

    out = jax.block_until_ready(lenet_forward(x, prep))
    ref = jax.block_until_ready(lenet_reference(x, params))

    assert out.shape == (2, 10), out.shape
    # Tolerance leaves headroom for MXU precision modes; structural errors
    # would be O(0.1) -- far above this bound.
    assert jnp.allclose(out, ref, atol=5e-3, rtol=5e-3), (out, ref)

    print("KERNEL_OK")
</pallas_src>

<mosaic_0001>
module attributes {stable_mosaic.version = 11 : i64} {
  func.func @lenet_kernel(%arg0: memref<64x32xf32, #tpu.memory_space<vmem>>, %arg1: memref<5x32x168xf32, #tpu.memory_space<vmem>>, %arg2: memref<5x168x160xf32, #tpu.memory_space<vmem>>, %arg3: memref<5x160x120xf32, #tpu.memory_space<vmem>>, %arg4: memref<32x64xf32, #tpu.memory_space<vmem>>, %arg5: memref<2x32xf32, #tpu.memory_space<vmem>>, %arg6: memref<5x256xf32, #tpu.memory_space<vmem>>, %arg7: memref<204x128xf32, #tpu.memory_space<vmem>>, %arg8: memref<2x10xf32, #tpu.memory_space<vmem>>) attributes {dimension_semantics = [], scalar_prefetch = 0 : i64, scratch_operands = 0 : i64, tpu.core_type = #tpu.core_type<tc>} {
    %c0 = arith.constant 0 : index
    %c0_0 = arith.constant 0 : index
    %0 = vector.load %arg0[%c0, %c0_0] : memref<64x32xf32, #tpu.memory_space<vmem>>, vector<64x32xf32>
    %c0_1 = arith.constant 0 : index
    %c0_2 = arith.constant 0 : index
    %c0_3 = arith.constant 0 : index
    %1 = vector.load %arg1[%c0_1, %c0_2, %c0_3] : memref<5x32x168xf32, #tpu.memory_space<vmem>>, vector<1x32x168xf32>
    %2 = vector.shape_cast %1 : vector<1x32x168xf32> to vector<32x168xf32>
    %cst = arith.constant dense<0.000000e+00> : vector<64x168xf32>
    %3 = tpu.matmul %0, %2, %cst {dimension_numbers = #tpu.dot_dimension_numbers<[1], [0], [0], [1], [0, 0, 1, 1], [], []>} : vector<64x32xf32>, vector<32x168xf32>, vector<64x168xf32> -> vector<64x168xf32>
    %c63_i32 = arith.constant 63 : i32
    %4 = tpu.dynamic_rotate %0 by %c63_i32 dim 0 : vector<64x32xf32>, i32 -> vector<64x32xf32>
    %c1 = arith.constant 1 : index
    %c0_4 = arith.constant 0 : index
    %c0_5 = arith.constant 0 : index
    %5 = vector.load %arg1[%c1, %c0_4, %c0_5] : memref<5x32x168xf32, #tpu.memory_space<vmem>>, vector<1x32x168xf32>
    %6 = vector.shape_cast %5 : vector<1x32x168xf32> to vector<32x168xf32>
    %cst_6 = arith.constant dense<0.000000e+00> : vector<64x168xf32>
    %7 = tpu.matmul %4, %6, %cst_6 {dimension_numbers = #tpu.dot_dimension_numbers<[1], [0], [0], [1], [0, 0, 1, 1], [], []>} : vector<64x32xf32>, vector<32x168xf32>, vector<64x168xf32> -> vector<64x168xf32>
    %8 = arith.addf %3, %7 : vector<64x168xf32>
    %c62_i32 = arith.constant 62 : i32
    %9 = tpu.dynamic_rotate %0 by %c62_i32 dim 0 : vector<64x32xf32>, i32 -> vector<64x32xf32>
    %c2 = arith.constant 2 : index
    %c0_7 = arith.constant 0 : index
    %c0_8 = arith.constant 0 : index
    %10 = vector.load %arg1[%c2, %c0_7, %c0_8] : memref<5x32x168xf32, #tpu.memory_space<vmem>>, vector<1x32x168xf32>
    %11 = vector.shape_cast %10 : vector<1x32x168xf32> to vector<32x168xf32>
    %cst_9 = arith.constant dense<0.000000e+00> : vector<64x168xf32>
    %12 = tpu.matmul %9, %11, %cst_9 {dimension_numbers = #tpu.dot_dimension_numbers<[1], [0], [0], [1], [0, 0, 1, 1], [], []>} : vector<64x32xf32>, vector<32x168xf32>, vector<64x168xf32> -> vector<64x168xf32>
    %13 = arith.addf %8, %12 : vector<64x168xf32>
    %c61_i32 = arith.constant 61 : i32
    %14 = tpu.dynamic_rotate %0 by %c61_i32 dim 0 : vector<64x32xf32>, i32 -> vector<64x32xf32>
    %c3 = arith.constant 3 : index
    %c0_10 = arith.constant 0 : index
    %c0_11 = arith.constant 0 : index
    %15 = vector.load %arg1[%c3, %c0_10, %c0_11] : memref<5x32x168xf32, #tpu.memory_space<vmem>>, vector<1x32x168xf32>
    %16 = vector.shape_cast %15 : vector<1x32x168xf32> to vector<32x168xf32>
    %cst_12 = arith.constant dense<0.000000e+00> : vector<64x168xf32>
    %17 = tpu.matmul %14, %16, %cst_12 {dimension_numbers = #tpu.dot_dimension_numbers<[1], [0], [0], [1], [0, 0, 1, 1], [], []>} : vector<64x32xf32>, vector<32x168xf32>, vector<64x168xf32> -> vector<64x168xf32>
    %18 = arith.addf %13, %17 : vector<64x168xf32>
    %c60_i32 = arith.constant 60 : i32
    %19 = tpu.dynamic_rotate %0 by %c60_i32 dim 0 : vector<64x32xf32>, i32 -> vector<64x32xf32>
    %c4 = arith.constant 4 : index
    %c0_13 = arith.constant 0 : index
    %c0_14 = arith.constant 0 : index
    %20 = vector.load %arg1[%c4, %c0_13, %c0_14] : memref<5x32x168xf32, #tpu.memory_space<vmem>>, vector<1x32x168xf32>
    %21 = vector.shape_cast %20 : vector<1x32x168xf32> to vector<32x168xf32>
    %cst_15 = arith.constant dense<0.000000e+00> : vector<64x168xf32>
    %22 = tpu.matmul %19, %21, %cst_15 {dimension_numbers = #tpu.dot_dimension_numbers<[1], [0], [0], [1], [0, 0, 1, 1], [], []>} : vector<64x32xf32>, vector<32x168xf32>, vector<64x168xf32> -> vector<64x168xf32>
    %23 = arith.addf %18, %22 : vector<64x168xf32>
    %c0_16 = arith.constant 0 : index
    %c0_17 = arith.constant 0 : index
    %24 = vector.load %arg6[%c0_16, %c0_17] : memref<5x256xf32, #tpu.memory_space<vmem>>, vector<1x168xf32>
    %25 = vector.broadcast %24 : vector<1x168xf32> to vector<64x168xf32>
    %26 = arith.addf %23, %25 : vector<64x168xf32>
    %cst_18 = arith.constant 0.000000e+00 : f32
    %27 = vector.broadcast %cst_18 : f32 to vector<64x168xf32>
    %28 = arith.maximumf %26, %27 : vector<64x168xf32>
    %c167_i32 = arith.constant 167 : i32
    %29 = tpu.dynamic_rotate %28 by %c167_i32 dim 1 : vector<64x168xf32>, i32 -> vector<64x168xf32>
    %30 = arith.maximumf %28, %29 : vector<64x168xf32>
    %c63_i32_19 = arith.constant 63 : i32
    %31 = tpu.dynamic_rotate %30 by %c63_i32_19 dim 0 : vector<64x168xf32>, i32 -> vector<64x168xf32>
    %32 = arith.maximumf %30, %31 : vector<64x168xf32>
    %c0_20 = arith.constant 0 : index
    %c0_21 = arith.constant 0 : index
    %33 = vector.load %arg4[%c0_20, %c0_21] : memref<32x64xf32, #tpu.memory_space<vmem>>, vector<32x64xf32>
    %cst_22 = arith.constant dense<0.000000e+00> : vector<32x168xf32>
    %34 = tpu.matmul %33, %32, %cst_22 {dimension_numbers = #tpu.dot_dimension_numbers<[1], [0], [0], [1], [0, 0, 1, 1], [], []>} : vector<32x64xf32>, vector<64x168xf32>, vector<32x168xf32> -> vector<32x168xf32>
    %c0_23 = arith.constant 0 : index
    %c0_24 = arith.constant 0 : index
    %c0_25 = arith.constant 0 : index
    %35 = vector.load %arg2[%c0_23, %c0_24, %c0_25] : memref<5x168x160xf32, #tpu.memory_space<vmem>>, vector<1x168x160xf32>
    %36 = vector.shape_cast %35 : vector<1x168x160xf32> to vector<168x160xf32>
    %cst_26 = arith.constant dense<0.000000e+00> : vector<32x160xf32>
    %37 = tpu.matmul %34, %36, %cst_26 {dimension_numbers = #tpu.dot_dimension_numbers<[1], [0], [0], [1], [0, 0, 1, 1], [], []>} : vector<32x168xf32>, vector<168x160xf32>, vector<32x160xf32> -> vector<32x160xf32>
    %c31_i32 = arith.constant 31 : i32
    %38 = tpu.dynamic_rotate %34 by %c31_i32 dim 0 : vector<32x168xf32>, i32 -> vector<32x168xf32>
    %c1_27 = arith.constant 1 : index
    %c0_28 = arith.constant 0 : index
    %c0_29 = arith.constant 0 : index
    %39 = vector.load %arg2[%c1_27, %c0_28, %c0_29] : memref<5x168x160xf32, #tpu.memory_space<vmem>>, vector<1x168x160xf32>
    %40 = vector.shape_cast %39 : vector<1x168x160xf32> to vector<168x160xf32>
    %cst_30 = arith.constant dense<0.000000e+00> : vector<32x160xf32>
    %41 = tpu.matmul %38, %40, %cst_30 {dimension_numbers = #tpu.dot_dimension_numbers<[1], [0], [0], [1], [0, 0, 1, 1], [], []>} : vector<32x168xf32>, vector<168x160xf32>, vector<32x160xf32> -> vector<32x160xf32>
    %42 = arith.addf %37, %41 : vector<32x160xf32>
    %c30_i32 = arith.constant 30 : i32
    %43 = tpu.dynamic_rotate %34 by %c30_i32 dim 0 : vector<32x168xf32>, i32 -> vector<32x168xf32>
    %c2_31 = arith.constant 2 : index
    %c0_32 = arith.constant 0 : index
    %c0_33 = arith.constant 0 : index
    %44 = vector.load %arg2[%c2_31, %c0_32, %c0_33] : memref<5x168x160xf32, #tpu.memory_space<vmem>>, vector<1x168x160xf32>
    %45 = vector.shape_cast %44 : vector<1x168x160xf32> to vector<168x160xf32>
    %cst_34 = arith.constant dense<0.000000e+00> : vector<32x160xf32>
    %46 = tpu.matmul %43, %45, %cst_34 {dimension_numbers = #tpu.dot_dimension_numbers<[1], [0], [0], [1], [0, 0, 1, 1], [], []>} : vector<32x168xf32>, vector<168x160xf32>, vector<32x160xf32> -> vector<32x160xf32>
    %47 = arith.addf %42, %46 : vector<32x160xf32>
    %c29_i32 = arith.constant 29 : i32
    %48 = tpu.dynamic_rotate %34 by %c29_i32 dim 0 : vector<32x168xf32>, i32 -> vector<32x168xf32>
    %c3_35 = arith.constant 3 : index
    %c0_36 = arith.constant 0 : index
    %c0_37 = arith.constant 0 : index
    %49 = vector.load %arg2[%c3_35, %c0_36, %c0_37] : memref<5x168x160xf32, #tpu.memory_space<vmem>>, vector<1x168x160xf32>
    %50 = vector.shape_cast %49 : vector<1x168x160xf32> to vector<168x160xf32>
    %cst_38 = arith.constant dense<0.000000e+00> : vector<32x160xf32>
    %51 = tpu.matmul %48, %50, %cst_38 {dimension_numbers = #tpu.dot_dimension_numbers<[1], [0], [0], [1], [0, 0, 1, 1], [], []>} : vector<32x168xf32>, vector<168x160xf32>, vector<32x160xf32> -> vector<32x160xf32>
    %52 = arith.addf %47, %51 : vector<32x160xf32>
    %c28_i32 = arith.constant 28 : i32
    %53 = tpu.dynamic_rotate %34 by %c28_i32 dim 0 : vector<32x168xf32>, i32 -> vector<32x168xf32>
    %c4_39 = arith.constant 4 : index
    %c0_40 = arith.constant 0 : index
    %c0_41 = arith.constant 0 : index
    %54 = vector.load %arg2[%c4_39, %c0_40, %c0_41] : memref<5x168x160xf32, #tpu.memory_space<vmem>>, vector<1x168x160xf32>
    %55 = vector.shape_cast %54 : vector<1x168x160xf32> to vector<168x160xf32>
    %cst_42 = arith.constant dense<0.000000e+00> : vector<32x160xf32>
    %56 = tpu.matmul %53, %55, %cst_42 {dimension_numbers = #tpu.dot_dimension_numbers<[1], [0], [0], [1], [0, 0, 1, 1], [], []>} : vector<32x168xf32>, vector<168x160xf32>, vector<32x160xf32> -> vector<32x160xf32>
    %57 = arith.addf %52, %56 : vector<32x160xf32>
    %c1_43 = arith.constant 1 : index
    %c0_44 = arith.constant 0 : index
    %58 = vector.load %arg6[%c1_43, %c0_44] : memref<5x256xf32, #tpu.memory_space<vmem>>, vector<1x160xf32>
    %59 = vector.broadcast %58 : vector<1x160xf32> to vector<32x160xf32>
    %60 = arith.addf %57, %59 : vector<32x160xf32>
    %cst_45 = arith.constant 0.000000e+00 : f32
    %61 = vector.broadcast %cst_45 : f32 to vector<32x160xf32>
    %62 = arith.maximumf %60, %61 : vector<32x160xf32>
    %c159_i32 = arith.constant 159 : i32
    %63 = tpu.dynamic_rotate %62 by %c159_i32 dim 1 : vector<32x160xf32>, i32 -> vector<32x160xf32>
    %64 = arith.maximumf %62, %63 : vector<32x160xf32>
    %c31_i32_46 = arith.constant 31 : i32
    %65 = tpu.dynamic_rotate %64 by %c31_i32_46 dim 0 : vector<32x160xf32>, i32 -> vector<32x160xf32>
    %66 = arith.maximumf %64, %65 : vector<32x160xf32>
    %c0_47 = arith.constant 0 : index
    %c0_48 = arith.constant 0 : index
    %c0_49 = arith.constant 0 : index
    %67 = vector.load %arg3[%c0_47, %c0_48, %c0_49] : memref<5x160x120xf32, #tpu.memory_space<vmem>>, vector<1x160x120xf32>
    %68 = vector.shape_cast %67 : vector<1x160x120xf32> to vector<160x120xf32>
    %cst_50 = arith.constant dense<0.000000e+00> : vector<32x120xf32>
    %69 = tpu.matmul %66, %68, %cst_50 {dimension_numbers = #tpu.dot_dimension_numbers<[1], [0], [0], [1], [0, 0, 1, 1], [], []>} : vector<32x160xf32>, vector<160x120xf32>, vector<32x120xf32> -> vector<32x120xf32>
    %c30_i32_51 = arith.constant 30 : i32
    %70 = tpu.dynamic_rotate %66 by %c30_i32_51 dim 0 : vector<32x160xf32>, i32 -> vector<32x160xf32>
    %c1_52 = arith.constant 1 : index
    %c0_53 = arith.constant 0 : index
    %c0_54 = arith.constant 0 : index
    %71 = vector.load %arg3[%c1_52, %c0_53, %c0_54] : memref<5x160x120xf32, #tpu.memory_space<vmem>>, vector<1x160x120xf32>
    %72 = vector.shape_cast %71 : vector<1x160x120xf32> to vector<160x120xf32>
    %cst_55 = arith.constant dense<0.000000e+00> : vector<32x120xf32>
    %73 = tpu.matmul %70, %72, %cst_55 {dimension_numbers = #tpu.dot_dimension_numbers<[1], [0], [0], [1], [0, 0, 1, 1], [], []>} : vector<32x160xf32>, vector<160x120xf32>, vector<32x120xf32> -> vector<32x120xf32>
    %74 = arith.addf %69, %73 : vector<32x120xf32>
    %c28_i32_56 = arith.constant 28 : i32
    %75 = tpu.dynamic_rotate %66 by %c28_i32_56 dim 0 : vector<32x160xf32>, i32 -> vector<32x160xf32>
    %c2_57 = arith.constant 2 : index
    %c0_58 = arith.constant 0 : index
    %c0_59 = arith.constant 0 : index
    %76 = vector.load %arg3[%c2_57, %c0_58, %c0_59] : memref<5x160x120xf32, #tpu.memory_space<vmem>>, vector<1x160x120xf32>
    %77 = vector.shape_cast %76 : vector<1x160x120xf32> to vector<160x120xf32>
    %cst_60 = arith.constant dense<0.000000e+00> : vector<32x120xf32>
    %78 = tpu.matmul %75, %77, %cst_60 {dimension_numbers = #tpu.dot_dimension_numbers<[1], [0], [0], [1], [0, 0, 1, 1], [], []>} : vector<32x160xf32>, vector<160x120xf32>, vector<32x120xf32> -> vector<32x120xf32>
    %79 = arith.addf %74, %78 : vector<32x120xf32>
    %c26_i32 = arith.constant 26 : i32
    %80 = tpu.dynamic_rotate %66 by %c26_i32 dim 0 : vector<32x160xf32>, i32 -> vector<32x160xf32>
    %c3_61 = arith.constant 3 : index
    %c0_62 = arith.constant 0 : index
    %c0_63 = arith.constant 0 : index
    %81 = vector.load %arg3[%c3_61, %c0_62, %c0_63] : memref<5x160x120xf32, #tpu.memory_space<vmem>>, vector<1x160x120xf32>
    %82 = vector.shape_cast %81 : vector<1x160x120xf32> to vector<160x120xf32>
    %cst_64 = arith.constant dense<0.000000e+00> : vector<32x120xf32>
    %83 = tpu.matmul %80, %82, %cst_64 {dimension_numbers = #tpu.dot_dimension_numbers<[1], [0], [0], [1], [0, 0, 1, 1], [], []>} : vector<32x160xf32>, vector<160x120xf32>, vector<32x120xf32> -> vector<32x120xf32>
    %84 = arith.addf %79, %83 : vector<32x120xf32>
    %c24_i32 = arith.constant 24 : i32
    %85 = tpu.dynamic_rotate %66 by %c24_i32 dim 0 : vector<32x160xf32>, i32 -> vector<32x160xf32>
    %c4_65 = arith.constant 4 : index
    %c0_66 = arith.constant 0 : index
    %c0_67 = arith.constant 0 : index
    %86 = vector.load %arg3[%c4_65, %c0_66, %c0_67] : memref<5x160x120xf32, #tpu.memory_space<vmem>>, vector<1x160x120xf32>
    %87 = vector.shape_cast %86 : vector<1x160x120xf32> to vector<160x120xf32>
    %cst_68 = arith.constant dense<0.000000e+00> : vector<32x120xf32>
    %88 = tpu.matmul %85, %87, %cst_68 {dimension_numbers = #tpu.dot_dimension_numbers<[1], [0], [0], [1], [0, 0, 1, 1], [], []>} : vector<32x160xf32>, vector<160x120xf32>, vector<32x120xf32> -> vector<32x120xf32>
    %89 = arith.addf %84, %88 : vector<32x120xf32>
    %c2_69 = arith.constant 2 : index
    %c0_70 = arith.constant 0 : index
    %90 = vector.load %arg6[%c2_69, %c0_70] : memref<5x256xf32, #tpu.memory_space<vmem>>, vector<1x120xf32>
    %91 = vector.broadcast %90 : vector<1x120xf32> to vector<32x120xf32>
    %92 = arith.addf %89, %91 : vector<32x120xf32>
    %cst_71 = arith.constant 0.000000e+00 : f32
    %93 = vector.broadcast %cst_71 : f32 to vector<32x120xf32>
    %94 = arith.maximumf %92, %93 : vector<32x120xf32>
    %c0_72 = arith.constant 0 : index
    %c0_73 = arith.constant 0 : index
    %95 = vector.load %arg7[%c0_72, %c0_73] : memref<204x128xf32, #tpu.memory_space<vmem>>, vector<120x84xf32>
    %cst_74 = arith.constant dense<0.000000e+00> : vector<32x84xf32>
    %96 = tpu.matmul %94, %95, %cst_74 {dimension_numbers = #tpu.dot_dimension_numbers<[1], [0], [0], [1], [0, 0, 1, 1], [], []>} : vector<32x120xf32>, vector<120x84xf32>, vector<32x84xf32> -> vector<32x84xf32>
    %c3_75 = arith.constant 3 : index
    %c0_76 = arith.constant 0 : index
    %97 = vector.load %arg6[%c3_75, %c0_76] : memref<5x256xf32, #tpu.memory_space<vmem>>, vector<1x84xf32>
    %98 = vector.broadcast %97 : vector<1x84xf32> to vector<32x84xf32>
    %99 = arith.addf %96, %98 : vector<32x84xf32>
    %cst_77 = arith.constant 0.000000e+00 : f32
    %100 = vector.broadcast %cst_77 : f32 to vector<32x84xf32>
    %101 = arith.maximumf %99, %100 : vector<32x84xf32>
    %c120 = arith.constant 120 : index
    %c0_78 = arith.constant 0 : index
    %102 = vector.load %arg7[%c120, %c0_78] : memref<204x128xf32, #tpu.memory_space<vmem>>, vector<84x10xf32>
    %cst_79 = arith.constant dense<0.000000e+00> : vector<32x10xf32>
    %103 = tpu.matmul %101, %102, %cst_79 {dimension_numbers = #tpu.dot_dimension_numbers<[1], [0], [0], [1], [0, 0, 1, 1], [], []>} : vector<32x84xf32>, vector<84x10xf32>, vector<32x10xf32> -> vector<32x10xf32>
    %c4_80 = arith.constant 4 : index
    %c0_81 = arith.constant 0 : index
    %104 = vector.load %arg6[%c4_80, %c0_81] : memref<5x256xf32, #tpu.memory_space<vmem>>, vector<1x10xf32>
    %105 = vector.broadcast %104 : vector<1x10xf32> to vector<32x10xf32>
    %106 = arith.addf %103, %105 : vector<32x10xf32>
    %c0_82 = arith.constant 0 : index
    %c0_83 = arith.constant 0 : index
    %107 = vector.load %arg5[%c0_82, %c0_83] : memref<2x32xf32, #tpu.memory_space<vmem>>, vector<2x32xf32>
    %cst_84 = arith.constant dense<0.000000e+00> : vector<2x10xf32>
    %108 = tpu.matmul %107, %106, %cst_84 {dimension_numbers = #tpu.dot_dimension_numbers<[1], [0], [0], [1], [0, 0, 1, 1], [], []>} : vector<2x32xf32>, vector<32x10xf32>, vector<2x10xf32> -> vector<2x10xf32>
    %c0_85 = arith.constant 0 : index
    %c0_86 = arith.constant 0 : index
    %109 = vector.load %arg8[%c0_85, %c0_86] : memref<2x10xf32, #tpu.memory_space<vmem>>, vector<2x10xf32>
    tpu.vector_store %arg8[%c0_85, %c0_86], %108 {strides = array<i32>} : memref<2x10xf32, #tpu.memory_space<vmem>>, vector<2x10xf32>,
    return
  }
}

</mosaic_0001>

<llo_original>
// kernel: lenet_forward.1
$region0: #{lenet_forward.1}
  #allocation0 [shape = 'u32[]', space=smem, size = 0x4, offset = 0x4, fixed_abs, tag = 'smem constant byte address 0x4 - core index']
  #allocation1 [shape = 'u32[72,128]{1,0:T(1,128)}', space=vmem, size = 0x9000, scoped, tag = 'internal scratch']
  %s0 = inlined_call_operand.vmem [shape: f32[64,32], index: 0, kind: input, shape index: {}]
  %s1 = inlined_call_operand.vmem [shape: f32[5,32,168], index: 1, kind: input, shape index: {}]
  %s2 = inlined_call_operand.vmem [shape: f32[5,168,160], index: 2, kind: input, shape index: {}]
  %s3 = inlined_call_operand.vmem [shape: f32[5,160,120], index: 3, kind: input, shape index: {}]
  %s4 = inlined_call_operand.vmem [shape: f32[32,64], index: 4, kind: input, shape index: {}]
  %s5 = inlined_call_operand.vmem [shape: f32[2,32], index: 5, kind: input, shape index: {}]
  %s6 = inlined_call_operand.vmem [shape: f32[5,256], index: 6, kind: input, shape index: {}]
  %s7 = inlined_call_operand.vmem [shape: f32[204,128], index: 7, kind: input, shape index: {}]
  %s8 = inlined_call_operand.hbm [shape: f32[2,10], index: 8, kind: output, shape index: {}]
  %s9 = sld [smem:[#allocation0]]
  $region42: #{lenet_forward.1} parent=0
    _
  %s11 = ssub.s32 1, %s9
  %s12 = scalar_select 0, %s11, %s9
  $region1: #{lenet_forward.1} parent=0
    #allocation2 [shape = 'u8[1024]{0}', space=vmem, size = 0x400, scoped, tag = 'output window, operand 0, single buffered']
    #allocation3 [shape = 's32[1]{0}', space=sflag, size = 0x4, scoped, tag = 'scoped memory for lenet_forward.1']
    %13 = vsyncpa [#allocation3], 0
    // Predicated region
    $region2: #{lenet_forward.1} parent=1 // pred_check
      _
    $region3: #{lenet_forward.1} parent=1 // pred_check_branch
      %15 = sbr.rel (0) target = $region5
    $region4: #{lenet_forward.1} parent=1 // pred_region
      _
    $region5: #{lenet_forward.1} parent=1 // pred_fallthru
      _
    // Predicated region
    $region6: #{lenet_forward.1} parent=1 // pred_check
      _
    $region7: #{lenet_forward.1} parent=1 // pred_check_branch
      %17 = sbr.rel (0) target = $region9
    $region8: #{lenet_forward.1} parent=1 // pred_region
      _
    $region9: #{lenet_forward.1} parent=1 // pred_fallthru
      _
    // Predicated region
    $region10: #{lenet_forward.1} parent=1 // pred_check
      _
    $region11: #{lenet_forward.1} parent=1 // pred_check_branch
      %19 = sbr.rel (0) target = $region13
    $region12: #{lenet_forward.1} parent=1 // pred_region
      _
    $region13: #{lenet_forward.1} parent=1 // pred_fallthru
      _
    // Predicated region
    $region14: #{lenet_forward.1} parent=1 // pred_check
      _
    $region15: #{lenet_forward.1} parent=1 // pred_check_branch
      %21 = sbr.rel (0) target = $region17
    $region16: #{lenet_forward.1} parent=1 // pred_region
      _
    $region17: #{lenet_forward.1} parent=1 // pred_fallthru
      _
    // Predicated region
    $region18: #{lenet_forward.1} parent=1 // pred_check
      _
    $region19: #{lenet_forward.1} parent=1 // pred_check_branch
      %23 = sbr.rel (0) target = $region21
    $region20: #{lenet_forward.1} parent=1 // pred_region
      _
    $region21: #{lenet_forward.1} parent=1 // pred_fallthru
      _
    // Predicated region
    $region22: #{lenet_forward.1} parent=1 // pred_check
      _
    $region23: #{lenet_forward.1} parent=1 // pred_check_branch
      %25 = sbr.rel (0) target = $region25
    $region24: #{lenet_forward.1} parent=1 // pred_region
      _
    $region25: #{lenet_forward.1} parent=1 // pred_fallthru
      _
    // Predicated region
    $region26: #{lenet_forward.1} parent=1 // pred_check
      _
    $region27: #{lenet_forward.1} parent=1 // pred_check_branch
      %27 = sbr.rel (0) target = $region29
    $region28: #{lenet_forward.1} parent=1 // pred_region
      _
    $region29: #{lenet_forward.1} parent=1 // pred_fallthru
      _
    // Predicated region
    $region30: #{lenet_forward.1} parent=1 // pred_check
      _
    $region31: #{lenet_forward.1} parent=1 // pred_check_branch
      %29 = sbr.rel (0) target = $region33
    $region32: #{lenet_forward.1} parent=1 // pred_region
      _
    $region33: #{lenet_forward.1} parent=1 // pred_fallthru
      _
    %v30 = vld [vmem:[%s0] sm:$0xff]
    %v31 = vld [vmem:[%s0 + $0x8] sm:$0xff]
    %v32 = vld [vmem:[%s0 + $0x10] sm:$0xff]
    %v33 = vld [vmem:[%s0 + $0x18] sm:$0xff]
    %v34 = vld [vmem:[%s0 + $0x20] sm:$0xff]
    %v35 = vld [vmem:[%s0 + $0x28] sm:$0xff]
    %v36 = vld [vmem:[%s0 + $0x30] sm:$0xff]
    %v37 = vld [vmem:[%s0 + $0x38] sm:$0xff]
    %v38 = vld [vmem:[%s1] sm:$0xff]
    %v39 = vld [vmem:[%s1 + $0x8] sm:$0xff]
    %v40 = vld [vmem:[%s1 + $0x10] sm:$0xff]
    %v41 = vld [vmem:[%s1 + $0x18] sm:$0xff]
    %v42 = vld [vmem:[%s1 + $0x20] sm:$0xff]
    %v43 = vld [vmem:[%s1 + $0x28] sm:$0xff]
    %v44 = vld [vmem:[%s1 + $0x30] sm:$0xff]
    %v45 = vld [vmem:[%s1 + $0x38] sm:$0xff]
    %v46 = vrot.slane %v30, 1
    %v47 = vrot.slane %v31, 1
    %v48 = vrot.slane %v32, 1
    %v49 = vrot.slane %v33, 1
    %v50 = vrot.slane %v34, 1
    %v51 = vrot.slane %v35, 1
    %v52 = vrot.slane %v36, 1
    %v53 = vrot.slane %v37, 1
    %v54 = vlaneseq
    %v55 = vshrl.u32 %v54, 7
    %vm56 = vcmp.lt.s32.totalorder %v55, 7
    %v57 = vsel %vm56, %v52, %v53
    %v58 = vsel %vm56, %v51, %v52
    %v59 = vsel %vm56, %v50, %v51
    %v60 = vsel %vm56, %v49, %v50
    %v61 = vsel %vm56, %v48, %v49
    %v62 = vsel %vm56, %v47, %v48
    %v63 = vsel %vm56, %v46, %v47
    %v64 = vsel %vm56, %v53, %v46
    %s65 = scalar_lea.vmem %s1, 64
    %v66 = vld [vmem:[%s65] sm:$0xff]
    %v67 = vld [vmem:[%s65 + $0x8] sm:$0xff]
    %v68 = vld [vmem:[%s65 + $0x10] sm:$0xff]
    %v69 = vld [vmem:[%s65 + $0x18] sm:$0xff]
    %v70 = vld [vmem:[%s65 + $0x20] sm:$0xff]
    %v71 = vld [vmem:[%s65 + $0x28] sm:$0xff]
    %v72 = vld [vmem:[%s65 + $0x30] sm:$0xff]
    %v73 = vld [vmem:[%s65 + $0x38] sm:$0xff]
    %vm74 = vcmask 261120
    %v76 = vsel %vm74, %v63, 0
    %v79 = vsel %vm74, %v62, 0
    %v82 = vsel %vm74, %v61, 0
    %v85 = vsel %vm74, %v60, 0
    %v88 = vsel %vm74, %v59, 0
    %v91 = vsel %vm74, %v58, 0
    %v94 = vsel %vm74, %v57, 0
    %v97 = vsel %vm74, %v64, 0
    %99 = vmatpush.msra.mxu0 0.0
    %100 = vmatpush.msra.mxu0 0.0
    %101 = vmatpush.msra.mxu0 0.0
    %102 = vmatpush.msra.mxu0 0.0
    %103 = vmatpush.msra.mxu0 0.0
    %104 = vmatpush.msra.mxu0 0.0
    %105 = vmatpush.msra.mxu0 0.0
    %106 = vmatpush.msra.mxu0 0.0
    %107 = vmatpush.msra.mxu0 0.0
    %108 = vmatpush.msra.mxu0 0.0
    %109 = vmatpush.msra.mxu0 0.0
    %110 = vmatpush.msra.mxu0 0.0
    %111 = vmatpush.msra.mxu0 %v72
    %112 = vmatpush.msra.mxu0 %v70
    %113 = vmatpush.msra.mxu0 %v68
    %114 = vmatpush.msra.mxu0 %v66
    %115 = vmatmul.f32.gmra.mxu0 %v76
    %v116 = vpop.f32.mrf.mxu0
    %v117 = vadd.f32 0.0, %v116
    %118 = vmatmul.f32.gmra.mxu0 %v79
    %v119 = vpop.f32.mrf.mxu0
    %v120 = vadd.f32 0.0, %v119
    %121 = vmatmul.f32.gmra.mxu0 %v82
    %v122 = vpop.f32.mrf.mxu0
    %v123 = vadd.f32 0.0, %v122
    %124 = vmatmul.f32.gmra.mxu0 %v85
    %v125 = vpop.f32.mrf.mxu0
    %v126 = vadd.f32 0.0, %v125
    %127 = vmatmul.f32.gmra.mxu0 %v88
    %v128 = vpop.f32.mrf.mxu0
    %v129 = vadd.f32 0.0, %v128
    %130 = vmatmul.f32.gmra.mxu0 %v91
    %v131 = vpop.f32.mrf.mxu0
    %v132 = vadd.f32 0.0, %v131
    %133 = vmatmul.f32.gmra.mxu0 %v94
    %v134 = vpop.f32.mrf.mxu0
    %v135 = vadd.f32 0.0, %v134
    %136 = vmatmul.f32.gmra.mxu0 %v97
    %v137 = vpop.f32.mrf.mxu0
    %v138 = vadd.f32 0.0, %v137
    %139 = vdwg.mxu0
    %140 = vmatpush.msra.mxu0 0.0
    %141 = vmatpush.msra.mxu0 0.0
    %142 = vmatpush.msra.mxu0 0.0
    %143 = vmatpush.msra.mxu0 0.0
    %144 = vmatpush.msra.mxu0 0.0
    %145 = vmatpush.msra.mxu0 0.0
    %146 = vmatpush.msra.mxu0 0.0
    %147 = vmatpush.msra.mxu0 0.0
    %148 = vmatpush.msra.mxu0 0.0
    %149 = vmatpush.msra.mxu0 0.0
    %150 = vmatpush.msra.mxu0 0.0
    %151 = vmatpush.msra.mxu0 0.0
    %152 = vmatpush.msra.mxu0 %v73
    %153 = vmatpush.msra.mxu0 %v71
    %154 = vmatpush.msra.mxu0 %v69
    %155 = vmatpush.msra.mxu0 %v67
    %156 = vmatmul.f32.gmra.mxu0 %v76
    %v157 = vpop.f32.mrf.mxu0
    %v158 = vadd.f32 0.0, %v157
    %159 = vmatmul.f32.gmra.mxu0 %v79
    %v160 = vpop.f32.mrf.mxu0
    %v161 = vadd.f32 0.0, %v160
    %162 = vmatmul.f32.gmra.mxu0 %v82
    %v163 = vpop.f32.mrf.mxu0
    %v164 = vadd.f32 0.0, %v163
    %165 = vmatmul.f32.gmra.mxu0 %v85
    %v166 = vpop.f32.mrf.mxu0
    %v167 = vadd.f32 0.0, %v166
    %168 = vmatmul.f32.gmra.mxu0 %v88
    %v169 = vpop.f32.mrf.mxu0
    %v170 = vadd.f32 0.0, %v169
    %171 = vmatmul.f32.gmra.mxu0 %v91
    %v172 = vpop.f32.mrf.mxu0
    %v173 = vadd.f32 0.0, %v172
    %174 = vmatmul.f32.gmra.mxu0 %v94
    %v175 = vpop.f32.mrf.mxu0
    %v176 = vadd.f32 0.0, %v175
    %177 = vmatmul.f32.gmra.mxu0 %v97
    %v178 = vpop.f32.mrf.mxu0
    %v179 = vadd.f32 0.0, %v178
    %180 = vdwg.mxu0
    %v182 = vsel %vm74, %v30, 0
    %v185 = vsel %vm74, %v31, 0
    %v188 = vsel %vm74, %v32, 0
    %v191 = vsel %vm74, %v33, 0
    %v194 = vsel %vm74, %v34, 0
    %v197 = vsel %vm74, %v35, 0
    %v200 = vsel %vm74, %v36, 0
    %v203 = vsel %vm74, %v37, 0
    %205 = vmatpush.msra.mxu0 0.0
    %206 = vmatpush.msra.mxu0 0.0
    %207 = vmatpush.msra.mxu0 0.0
    %208 = vmatpush.msra.mxu0 0.0
    %209 = vmatpush.msra.mxu0 0.0
    %210 = vmatpush.msra.mxu0 0.0
    %211 = vmatpush.msra.mxu0 0.0
    %212 = vmatpush.msra.mxu0 0.0
    %213 = vmatpush.msra.mxu0 0.0
    %214 = vmatpush.msra.mxu0 0.0
    %215 = vmatpush.msra.mxu0 0.0
    %216 = vmatpush.msra.mxu0 0.0
    %217 = vmatpush.msra.mxu0 %v44
    %218 = vmatpush.msra.mxu0 %v42
    %219 = vmatpush.msra.mxu0 %v40
    %220 = vmatpush.msra.mxu0 %v38
    %221 = vmatmul.f32.gmra.mxu0 %v182
    %v222 = vpop.f32.mrf.mxu0
    %v223 = vadd.f32 %v117, %v222
    %224 = vmatmul.f32.gmra.mxu0 %v185
    %v225 = vpop.f32.mrf.mxu0
    %v226 = vadd.f32 %v120, %v225
    %227 = vmatmul.f32.gmra.mxu0 %v188
    %v228 = vpop.f32.mrf.mxu0
    %v229 = vadd.f32 %v123, %v228
    %230 = vmatmul.f32.gmra.mxu0 %v191
    %v231 = vpop.f32.mrf.mxu0
    %v232 = vadd.f32 %v126, %v231
    %233 = vmatmul.f32.gmra.mxu0 %v194
    %v234 = vpop.f32.mrf.mxu0
    %v235 = vadd.f32 %v129, %v234
    %236 = vmatmul.f32.gmra.mxu0 %v197
    %v237 = vpop.f32.mrf.mxu0
    %v238 = vadd.f32 %v132, %v237
    %239 = vmatmul.f32.gmra.mxu0 %v200
    %v240 = vpop.f32.mrf.mxu0
    %v241 = vadd.f32 %v135, %v240
    %242 = vmatmul.f32.gmra.mxu0 %v203
    %v243 = vpop.f32.mrf.mxu0
    %v244 = vadd.f32 %v138, %v243
    %245 = vdwg.mxu0
    %246 = vmatpush.msra.mxu0 0.0
    %247 = vmatpush.msra.mxu0 0.0
    %248 = vmatpush.msra.mxu0 0.0
    %249 = vmatpush.msra.mxu0 0.0
    %250 = vmatpush.msra.mxu0 0.0
    %251 = vmatpush.msra.mxu0 0.0
    %252 = vmatpush.msra.mxu0 0.0
    %253 = vmatpush.msra.mxu0 0.0
    %254 = vmatpush.msra.mxu0 0.0
    %255 = vmatpush.msra.mxu0 0.0
    %256 = vmatpush.msra.mxu0 0.0
    %257 = vmatpush.msra.mxu0 0.0
    %258 = vmatpush.msra.mxu0 %v45
    %259 = vmatpush.msra.mxu0 %v43
    %260 = vmatpush.msra.mxu0 %v41
    %261 = vmatpush.msra.mxu0 %v39
    %262 = vmatmul.f32.gmra.mxu0 %v182
    %v263 = vpop.f32.mrf.mxu0
    %v264 = vadd.f32 %v158, %v263
    %265 = vmatmul.f32.gmra.mxu0 %v185
    %v266 = vpop.f32.mrf.mxu0
    %v267 = vadd.f32 %v161, %v266
    %268 = vmatmul.f32.gmra.mxu0 %v188
    %v269 = vpop.f32.mrf.mxu0
    %v270 = vadd.f32 %v164, %v269
    %271 = vmatmul.f32.gmra.mxu0 %v191
    %v272 = vpop.f32.mrf.mxu0
    %v273 = vadd.f32 %v167, %v272
    %274 = vmatmul.f32.gmra.mxu0 %v194
    %v275 = vpop.f32.mrf.mxu0
    %v276 = vadd.f32 %v170, %v275
    %277 = vmatmul.f32.gmra.mxu0 %v197
    %v278 = vpop.f32.mrf.mxu0
    %v279 = vadd.f32 %v173, %v278
    %280 = vmatmul.f32.gmra.mxu0 %v200
    %v281 = vpop.f32.mrf.mxu0
    %v282 = vadd.f32 %v176, %v281
    %283 = vmatmul.f32.gmra.mxu0 %v203
    %v284 = vpop.f32.mrf.mxu0
    %v285 = vadd.f32 %v179, %v284
    %286 = vdwg.mxu0
    %v287 = vrot.slane %v30, 2
    %v288 = vrot.slane %v31, 2
    %v289 = vrot.slane %v32, 2
    %v290 = vrot.slane %v33, 2
    %v291 = vrot.slane %v34, 2
    %v292 = vrot.slane %v35, 2
    %v293 = vrot.slane %v36, 2
    %v294 = vrot.slane %v37, 2
    %vm295 = vcmp.lt.s32.totalorder %v55, 6
    %v296 = vsel %vm295, %v293, %v294
    %v297 = vsel %vm295, %v292, %v293
    %v298 = vsel %vm295, %v291, %v292
    %v299 = vsel %vm295, %v290, %v291
    %v300 = vsel %vm295, %v289, %v290
    %v301 = vsel %vm295, %v288, %v289
    %v302 = vsel %vm295, %v287, %v288
    %v303 = vsel %vm295, %v294, %v287
    %s304 = scalar_lea.vmem %s1, 128
    %v305 = vld [vmem:[%s304] sm:$0xff]
    %v306 = vld [vmem:[%s304 + $0x8] sm:$0xff]
    %v307 = vld [vmem:[%s304 + $0x10] sm:$0xff]
    %v308 = vld [vmem:[%s304 + $0x18] sm:$0xff]
    %v309 = vld [vmem:[%s304 + $0x20] sm:$0xff]
    %v310 = vld [vmem:[%s304 + $0x28] sm:$0xff]
    %v311 = vld [vmem:[%s304 + $0x30] sm:$0xff]
    %v312 = vld [vmem:[%s304 + $0x38] sm:$0xff]
    %v314 = vsel %vm74, %v302, 0
    %v317 = vsel %vm74, %v301, 0
    %v320 = vsel %vm74, %v300, 0
    %v323 = vsel %vm74, %v299, 0
    %v326 = vsel %vm74, %v298, 0
    %v329 = vsel %vm74, %v297, 0
    %v332 = vsel %vm74, %v296, 0
    %v335 = vsel %vm74, %v303, 0
    %337 = vmatpush.msra.mxu0 0.0
    %338 = vmatpush.msra.mxu0 0.0
    %339 = vmatpush.msra.mxu0 0.0
    %340 = vmatpush.msra.mxu0 0.0
    %341 = vmatpush.msra.mxu0 0.0
    %342 = vmatpush.msra.mxu0 0.0
    %343 = vmatpush.msra.mxu0 0.0
    %344 = vmatpush.msra.mxu0 0.0
    %345 = vmatpush.msra.mxu0 0.0
    %346 = vmatpush.msra.mxu0 0.0
    %347 = vmatpush.msra.mxu0 0.0
    %348 = vmatpush.msra.mxu0 0.0
    %349 = vmatpush.msra.mxu0 %v311
    %350 = vmatpush.msra.mxu0 %v309
    %351 = vmatpush.msra.mxu0 %v307
    %352 = vmatpush.msra.mxu0 %v305
    %353 = vmatmul.f32.gmra.mxu0 %v314
    %v354 = vpop.f32.mrf.mxu0
    %v355 = vadd.f32 0.0, %v354
    %356 = vmatmul.f32.gmra.mxu0 %v317
    %v357 = vpop.f32.mrf.mxu0
    %v358 = vadd.f32 0.0, %v357
    %359 = vmatmul.f32.gmra.mxu0 %v320
    %v360 = vpop.f32.mrf.mxu0
    %v361 = vadd.f32 0.0, %v360
    %362 = vmatmul.f32.gmra.mxu0 %v323
    %v363 = vpop.f32.mrf.mxu0
    %v364 = vadd.f32 0.0, %v363
    %365 = vmatmul.f32.gmra.mxu0 %v326
    %v366 = vpop.f32.mrf.mxu0
    %v367 = vadd.f32 0.0, %v366
    %368 = vmatmul.f32.gmra.mxu0 %v329
    %v369 = vpop.f32.mrf.mxu0
    %v370 = vadd.f32 0.0, %v369
    %371 = vmatmul.f32.gmra.mxu0 %v332
    %v372 = vpop.f32.mrf.mxu0
    %v373 = vadd.f32 0.0, %v372
    %374 = vmatmul.f32.gmra.mxu0 %v335
    %v375 = vpop.f32.mrf.mxu0
    %v376 = vadd.f32 0.0, %v375
    %377 = vdwg.mxu0
    %378 = vmatpush.msra.mxu0 0.0
    %379 = vmatpush.msra.mxu0 0.0
    %380 = vmatpush.msra.mxu0 0.0
    %381 = vmatpush.msra.mxu0 0.0
    %382 = vmatpush.msra.mxu0 0.0
    %383 = vmatpush.msra.mxu0 0.0
    %384 = vmatpush.msra.mxu0 0.0
    %385 = vmatpush.msra.mxu0 0.0
    %386 = vmatpush.msra.mxu0 0.0
    %387 = vmatpush.msra.mxu0 0.0
    %388 = vmatpush.msra.mxu0 0.0
    %389 = vmatpush.msra.mxu0 0.0
    %390 = vmatpush.msra.mxu0 %v312
    %391 = vmatpush.msra.mxu0 %v310
    %392 = vmatpush.msra.mxu0 %v308
    %393 = vmatpush.msra.mxu0 %v306
    %394 = vmatmul.f32.gmra.mxu0 %v314
    %v395 = vpop.f32.mrf.mxu0
    %v396 = vadd.f32 0.0, %v395
    %397 = vmatmul.f32.gmra.mxu0 %v317
    %v398 = vpop.f32.mrf.mxu0
    %v399 = vadd.f32 0.0, %v398
    %400 = vmatmul.f32.gmra.mxu0 %v320
    %v401 = vpop.f32.mrf.mxu0
    %v402 = vadd.f32 0.0, %v401
    %403 = vmatmul.f32.gmra.mxu0 %v323
    %v404 = vpop.f32.mrf.mxu0
    %v405 = vadd.f32 0.0, %v404
    %406 = vmatmul.f32.gmra.mxu0 %v326
    %v407 = vpop.f32.mrf.mxu0
    %v408 = vadd.f32 0.0, %v407
    %409 = vmatmul.f32.gmra.mxu0 %v329
    %v410 = vpop.f32.mrf.mxu0
    %v411 = vadd.f32 0.0, %v410
    %412 = vmatmul.f32.gmra.mxu0 %v332
    %v413 = vpop.f32.mrf.mxu0
    %v414 = vadd.f32 0.0, %v413
    %415 = vmatmul.f32.gmra.mxu0 %v335
    %v416 = vpop.f32.mrf.mxu0
    %v417 = vadd.f32 0.0, %v416
    %418 = vdwg.mxu0
    %v419 = vadd.f32 %v223, %v355
    %v420 = vadd.f32 %v264, %v396
    %v421 = vadd.f32 %v226, %v358
    %v422 = vadd.f32 %v267, %v399
    %v423 = vadd.f32 %v229, %v361
    %v424 = vadd.f32 %v270, %v402
    %v425 = vadd.f32 %v232, %v364
    %v426 = vadd.f32 %v273, %v405
    %v427 = vadd.f32 %v235, %v367
    %v428 = vadd.f32 %v276, %v408
    %v429 = vadd.f32 %v238, %v370
    %v430 = vadd.f32 %v279, %v411
    %v431 = vadd.f32 %v241, %v373
    %v432 = vadd.f32 %v282, %v414
    %v433 = vadd.f32 %v244, %v376
    %v434 = vadd.f32 %v285, %v417
    %v435 = vrot.slane %v30, 3
    %v436 = vrot.slane %v31, 3
    %v437 = vrot.slane %v32, 3
    %v438 = vrot.slane %v33, 3
    %v439 = vrot.slane %v34, 3
    %v440 = vrot.slane %v35, 3
    %v441 = vrot.slane %v36, 3
    %v442 = vrot.slane %v37, 3
    %vm443 = vcmp.lt.s32.totalorder %v55, 5
    %v444 = vsel %vm443, %v441, %v442
    %v445 = vsel %vm443, %v440, %v441
    %v446 = vsel %vm443, %v439, %v440
    %v447 = vsel %vm443, %v438, %v439
    %v448 = vsel %vm443, %v437, %v438
    %v449 = vsel %vm443, %v436, %v437
    %v450 = vsel %vm443, %v435, %v436
    %v451 = vsel %vm443, %v442, %v435
    %s452 = scalar_lea.vmem %s1, 192
    %v453 = vld [vmem:[%s452] sm:$0xff]
    %v454 = vld [vmem:[%s452 + $0x8] sm:$0xff]
    %v455 = vld [vmem:[%s452 + $0x10] sm:$0xff]
    %v456 = vld [vmem:[%s452 + $0x18] sm:$0xff]
    %v457 = vld [vmem:[%s452 + $0x20] sm:$0xff]
    %v458 = vld [vmem:[%s452 + $0x28] sm:$0xff]
    %v459 = vld [vmem:[%s452 + $0x30] sm:$0xff]
    %v460 = vld [vmem:[%s452 + $0x38] sm:$0xff]
    %v462 = vsel %vm74, %v450, 0
    %v465 = vsel %vm74, %v449, 0
    %v468 = vsel %vm74, %v448, 0
    %v471 = vsel %vm74, %v447, 0
    %v474 = vsel %vm74, %v446, 0
    %v477 = vsel %vm74, %v445, 0
    %v480 = vsel %vm74, %v444, 0
    %v483 = vsel %vm74, %v451, 0
    %485 = vmatpush.msra.mxu0 0.0
    %486 = vmatpush.msra.mxu0 0.0
    %487 = vmatpush.msra.mxu0 0.0
    %488 = vmatpush.msra.mxu0 0.0
    %489 = vmatpush.msra.mxu0 0.0
    %490 = vmatpush.msra.mxu0 0.0
    %491 = vmatpush.msra.mxu0 0.0
    %492 = vmatpush.msra.mxu0 0.0
    %493 = vmatpush.msra.mxu0 0.0
    %494 = vmatpush.msra.mxu0 0.0
    %495 = vmatpush.msra.mxu0 0.0
    %496 = vmatpush.msra.mxu0 0.0
    %497 = vmatpush.msra.mxu0 %v459
    %498 = vmatpush.msra.mxu0 %v457
    %499 = vmatpush.msra.mxu0 %v455
    %500 = vmatpush.msra.mxu0 %v453
    %501 = vmatmul.f32.gmra.mxu0 %v462
    %v502 = vpop.f32.mrf.mxu0
    %v503 = vadd.f32 0.0, %v502
    %504 = vmatmul.f32.gmra.mxu0 %v465
    %v505 = vpop.f32.mrf.mxu0
    %v506 = vadd.f32 0.0, %v505
    %507 = vmatmul.f32.gmra.mxu0 %v468
    %v508 = vpop.f32.mrf.mxu0
    %v509 = vadd.f32 0.0, %v508
    %510 = vmatmul.f32.gmra.mxu0 %v471
    %v511 = vpop.f32.mrf.mxu0
    %v512 = vadd.f32 0.0, %v511
    %513 = vmatmul.f32.gmra.mxu0 %v474
    %v514 = vpop.f32.mrf.mxu0
    %v515 = vadd.f32 0.0, %v514
    %516 = vmatmul.f32.gmra.mxu0 %v477
    %v517 = vpop.f32.mrf.mxu0
    %v518 = vadd.f32 0.0, %v517
    %519 = vmatmul.f32.gmra.mxu0 %v480
    %v520 = vpop.f32.mrf.mxu0
    %v521 = vadd.f32 0.0, %v520
    %522 = vmatmul.f32.gmra.mxu0 %v483
    %v523 = vpop.f32.mrf.mxu0
    %v524 = vadd.f32 0.0, %v523
    %525 = vdwg.mxu0
    %526 = vmatpush.msra.mxu0 0.0
    %527 = vmatpush.msra.mxu0 0.0
    %528 = vmatpush.msra.mxu0 0.0
    %529 = vmatpush.msra.mxu0 0.0
    %530 = vmatpush.msra.mxu0 0.0
    %531 = vmatpush.msra.mxu0 0.0
    %532 = vmatpush.msra.mxu0 0.0
    %533 = vmatpush.msra.mxu0 0.0
    %534 = vmatpush.msra.mxu0 0.0
    %535 = vmatpush.msra.mxu0 0.0
    %536 = vmatpush.msra.mxu0 0.0
    %537 = vmatpush.msra.mxu0 0.0
    %538 = vmatpush.msra.mxu0 %v460
    %539 = vmatpush.msra.mxu0 %v458
    %540 = vmatpush.msra.mxu0 %v456
    %541 = vmatpush.msra.mxu0 %v454
    %542 = vmatmul.f32.gmra.mxu0 %v462
    %v543 = vpop.f32.mrf.mxu0
    %v544 = vadd.f32 0.0, %v543
    %545 = vmatmul.f32.gmra.mxu0 %v465
    %v546 = vpop.f32.mrf.mxu0
    %v547 = vadd.f32 0.0, %v546
    %548 = vmatmul.f32.gmra.mxu0 %v468
    %v549 = vpop.f32.mrf.mxu0
    %v550 = vadd.f32 0.0, %v549
    %551 = vmatmul.f32.gmra.mxu0 %v471
    %v552 = vpop.f32.mrf.mxu0
    %v553 = vadd.f32 0.0, %v552
    %554 = vmatmul.f32.gmra.mxu0 %v474
    %v555 = vpop.f32.mrf.mxu0
    %v556 = vadd.f32 0.0, %v555
    %557 = vmatmul.f32.gmra.mxu0 %v477
    %v558 = vpop.f32.mrf.mxu0
    %v559 = vadd.f32 0.0, %v558
    %560 = vmatmul.f32.gmra.mxu0 %v480
    %v561 = vpop.f32.mrf.mxu0
    %v562 = vadd.f32 0.0, %v561
    %563 = vmatmul.f32.gmra.mxu0 %v483
    %v564 = vpop.f32.mrf.mxu0
    %v565 = vadd.f32 0.0, %v564
    %566 = vdwg.mxu0
    %v567 = vadd.f32 %v419, %v503
    %v568 = vadd.f32 %v420, %v544
    %v569 = vadd.f32 %v421, %v506
    %v570 = vadd.f32 %v422, %v547
    %v571 = vadd.f32 %v423, %v509
    %v572 = vadd.f32 %v424, %v550
    %v573 = vadd.f32 %v425, %v512
    %v574 = vadd.f32 %v426, %v553
    %v575 = vadd.f32 %v427, %v515
    %v576 = vadd.f32 %v428, %v556
    %v577 = vadd.f32 %v429, %v518
    %v578 = vadd.f32 %v430, %v559
    %v579 = vadd.f32 %v431, %v521
    %v580 = vadd.f32 %v432, %v562
    %v581 = vadd.f32 %v433, %v524
    %v582 = vadd.f32 %v434, %v565
    %v583 = vrot.slane %v30, 4
    %v584 = vrot.slane %v31, 4
    %v585 = vrot.slane %v32, 4
    %v586 = vrot.slane %v33, 4
    %v587 = vrot.slane %v34, 4
    %v588 = vrot.slane %v35, 4
    %v589 = vrot.slane %v36, 4
    %v590 = vrot.slane %v37, 4
    %vm591 = vcmp.lt.s32.totalorder %v55, 4
    %v592 = vsel %vm591, %v589, %v590
    %v593 = vsel %vm591, %v588, %v589
    %v594 = vsel %vm591, %v587, %v588
    %v595 = vsel %vm591, %v586, %v587
    %v596 = vsel %vm591, %v585, %v586
    %v597 = vsel %vm591, %v584, %v585
    %v598 = vsel %vm591, %v583, %v584
    %v599 = vsel %vm591, %v590, %v583
    %s600 = scalar_lea.vmem %s1, 256
    %v601 = vld [vmem:[%s600] sm:$0xff]
    %v602 = vld [vmem:[%s600 + $0x8] sm:$0xff]
    %v603 = vld [vmem:[%s600 + $0x10] sm:$0xff]
    %v604 = vld [vmem:[%s600 + $0x18] sm:$0xff]
    %v605 = vld [vmem:[%s600 + $0x20] sm:$0xff]
    %v606 = vld [vmem:[%s600 + $0x28] sm:$0xff]
    %v607 = vld [vmem:[%s600 + $0x30] sm:$0xff]
    %v608 = vld [vmem:[%s600 + $0x38] sm:$0xff]
    %v610 = vsel %vm74, %v598, 0
    %v613 = vsel %vm74, %v597, 0
    %v616 = vsel %vm74, %v596, 0
    %v619 = vsel %vm74, %v595, 0
    %v622 = vsel %vm74, %v594, 0
    %v625 = vsel %vm74, %v593, 0
    %v628 = vsel %vm74, %v592, 0
    %v631 = vsel %vm74, %v599, 0
    %633 = vmatpush.msra.mxu0 0.0
    %634 = vmatpush.msra.mxu0 0.0
    %635 = vmatpush.msra.mxu0 0.0
    %636 = vmatpush.msra.mxu0 0.0
    %637 = vmatpush.msra.mxu0 0.0
    %638 = vmatpush.msra.mxu0 0.0
    %639 = vmatpush.msra.mxu0 0.0
    %640 = vmatpush.msra.mxu0 0.0
    %641 = vmatpush.msra.mxu0 0.0
    %642 = vmatpush.msra.mxu0 0.0
    %643 = vmatpush.msra.mxu0 0.0
    %644 = vmatpush.msra.mxu0 0.0
    %645 = vmatpush.msra.mxu0 %v607
    %646 = vmatpush.msra.mxu0 %v605
    %647 = vmatpush.msra.mxu0 %v603
    %648 = vmatpush.msra.mxu0 %v601
    %649 = vmatmul.f32.gmra.mxu0 %v610
    %v650 = vpop.f32.mrf.mxu0
    %v651 = vadd.f32 0.0, %v650
    %652 = vmatmul.f32.gmra.mxu0 %v613
    %v653 = vpop.f32.mrf.mxu0
    %v654 = vadd.f32 0.0, %v653
    %655 = vmatmul.f32.gmra.mxu0 %v616
    %v656 = vpop.f32.mrf.mxu0
    %v657 = vadd.f32 0.0, %v656
    %658 = vmatmul.f32.gmra.mxu0 %v619
    %v659 = vpop.f32.mrf.mxu0
    %v660 = vadd.f32 0.0, %v659
    %661 = vmatmul.f32.gmra.mxu0 %v622
    %v662 = vpop.f32.mrf.mxu0
    %v663 = vadd.f32 0.0, %v662
    %664 = vmatmul.f32.gmra.mxu0 %v625
    %v665 = vpop.f32.mrf.mxu0
    %v666 = vadd.f32 0.0, %v665
    %667 = vmatmul.f32.gmra.mxu0 %v628
    %v668 = vpop.f32.mrf.mxu0
    %v669 = vadd.f32 0.0, %v668
    %670 = vmatmul.f32.gmra.mxu0 %v631
    %v671 = vpop.f32.mrf.mxu0
    %v672 = vadd.f32 0.0, %v671
    %673 = vdwg.mxu0
    %674 = vmatpush.msra.mxu0 0.0
    %675 = vmatpush.msra.mxu0 0.0
    %676 = vmatpush.msra.mxu0 0.0
    %677 = vmatpush.msra.mxu0 0.0
    %678 = vmatpush.msra.mxu0 0.0
    %679 = vmatpush.msra.mxu0 0.0
    %680 = vmatpush.msra.mxu0 0.0
    %681 = vmatpush.msra.mxu0 0.0
    %682 = vmatpush.msra.mxu0 0.0
    %683 = vmatpush.msra.mxu0 0.0
    %684 = vmatpush.msra.mxu0 0.0
    %685 = vmatpush.msra.mxu0 0.0
    %686 = vmatpush.msra.mxu0 %v608
    %687 = vmatpush.msra.mxu0 %v606
    %688 = vmatpush.msra.mxu0 %v604
    %689 = vmatpush.msra.mxu0 %v602
    %690 = vmatmul.f32.gmra.mxu0 %v610
    %v691 = vpop.f32.mrf.mxu0
    %v692 = vadd.f32 0.0, %v691
    %693 = vmatmul.f32.gmra.mxu0 %v613
    %v694 = vpop.f32.mrf.mxu0
    %v695 = vadd.f32 0.0, %v694
    %696 = vmatmul.f32.gmra.mxu0 %v616
    %v697 = vpop.f32.mrf.mxu0
    %v698 = vadd.f32 0.0, %v697
    %699 = vmatmul.f32.gmra.mxu0 %v619
    %v700 = vpop.f32.mrf.mxu0
    %v701 = vadd.f32 0.0, %v700
    %702 = vmatmul.f32.gmra.mxu0 %v622
    %v703 = vpop.f32.mrf.mxu0
    %v704 = vadd.f32 0.0, %v703
    %705 = vmatmul.f32.gmra.mxu0 %v625
    %v706 = vpop.f32.mrf.mxu0
    %v707 = vadd.f32 0.0, %v706
    %708 = vmatmul.f32.gmra.mxu0 %v628
    %v709 = vpop.f32.mrf.mxu0
    %v710 = vadd.f32 0.0, %v709
    %711 = vmatmul.f32.gmra.mxu0 %v631
    %v712 = vpop.f32.mrf.mxu0
    %v713 = vadd.f32 0.0, %v712
    %714 = vdwg.mxu0
    %v715 = vadd.f32 %v567, %v651
    %v716 = vadd.f32 %v568, %v692
    %v717 = vadd.f32 %v569, %v654
    %v718 = vadd.f32 %v570, %v695
    %v719 = vadd.f32 %v571, %v657
    %v720 = vadd.f32 %v572, %v698
    %v721 = vadd.f32 %v573, %v660
    %v722 = vadd.f32 %v574, %v701
    %v723 = vadd.f32 %v575, %v663
    %v724 = vadd.f32 %v576, %v704
    %v725 = vadd.f32 %v577, %v666
    %v726 = vadd.f32 %v578, %v707
    %v727 = vadd.f32 %v579, %v669
    %v728 = vadd.f32 %v580, %v710
    %v729 = vadd.f32 %v581, %v672
    %v730 = vadd.f32 %v582, %v713
    %v731 = vld [vmem:[%s6] ss:$8 sm:$0x3]
    %v733 = vperm.slane %v731, 0
    %v734 = vperm.slane %v731, 1
    %v737 = vadd.f32 %v715, %v733
    %v738 = vadd.f32 %v716, %v734
    %v739 = vadd.f32 %v717, %v733
    %v740 = vadd.f32 %v718, %v734
    %v741 = vadd.f32 %v719, %v733
    %v742 = vadd.f32 %v720, %v734
    %v743 = vadd.f32 %v721, %v733
    %v744 = vadd.f32 %v722, %v734
    %v745 = vadd.f32 %v723, %v733
    %v746 = vadd.f32 %v724, %v734
    %v747 = vadd.f32 %v725, %v733
    %v748 = vadd.f32 %v726, %v734
    %v749 = vadd.f32 %v727, %v733
    %v750 = vadd.f32 %v728, %v734
    %v751 = vadd.f32 %v729, %v733
    %v752 = vadd.f32 %v730, %v734
    %v753 = vmax.f32 %v737, 0.0
    %v754 = vmax.f32 %v738, 0.0
    %v755 = vmax.f32 %v739, 0.0
    %v756 = vmax.f32 %v740, 0.0
    %v757 = vmax.f32 %v741, 0.0
    %v758 = vmax.f32 %v742, 0.0
    %v759 = vmax.f32 %v743, 0.0
    %v760 = vmax.f32 %v744, 0.0
    %v761 = vmax.f32 %v745, 0.0
    %v762 = vmax.f32 %v746, 0.0
    %v763 = vmax.f32 %v747, 0.0
    %v764 = vmax.f32 %v748, 0.0
    %v765 = vmax.f32 %v749, 0.0
    %v766 = vmax.f32 %v750, 0.0
    %v767 = vmax.f32 %v751, 0.0
    %v768 = vmax.f32 %v752, 0.0
    %vm769 = vcmask 1047872
    %770 = vrot.lane.b32.xlu0 %v753, 40
    %v771 = vpop.permute.xlu0 %770
    %772 = vrot.lane.b32.xlu0 %v755, 40
    %v773 = vpop.permute.xlu0 %772
    %774 = vrot.lane.b32.xlu0 %v757, 40
    %v775 = vpop.permute.xlu0 %774
    %776 = vrot.lane.b32.xlu0 %v759, 40
    %v777 = vpop.permute.xlu0 %776
    %778 = vrot.lane.b32.xlu0 %v761, 40
    %v779 = vpop.permute.xlu0 %778
    %780 = vrot.lane.b32.xlu0 %v763, 40
    %v781 = vpop.permute.xlu0 %780
    %782 = vrot.lane.b32.xlu0 %v765, 40
    %v783 = vpop.permute.xlu0 %782
    %784 = vrot.lane.b32.xlu0 %v767, 40
    %v785 = vpop.permute.xlu0 %784
    %v786 = vsel %vm769, %v771, %v754
    %v787 = vsel %vm769, %v773, %v756
    %v788 = vsel %vm769, %v775, %v758
    %v789 = vsel %vm769, %v777, %v760
    %v790 = vsel %vm769, %v779, %v762
    %v791 = vsel %vm769, %v781, %v764
    %v792 = vsel %vm769, %v783, %v766
    %v793 = vsel %vm769, %v785, %v768
    %810 = vrot.lane.b32.xlu0 %v753, 127
    %v811 = vpop.permute.xlu0 %810
    %812 = vrot.lane.b32.xlu0 %v786, 127
    %v813 = vpop.permute.xlu0 %812
    %814 = vrot.lane.b32.xlu0 %v755, 127
    %v815 = vpop.permute.xlu0 %814
    %816 = vrot.lane.b32.xlu0 %v787, 127
    %v817 = vpop.permute.xlu0 %816
    %818 = vrot.lane.b32.xlu0 %v757, 127
    %v819 = vpop.permute.xlu0 %818
    %820 = vrot.lane.b32.xlu0 %v788, 127
    %v821 = vpop.permute.xlu0 %820
    %822 = vrot.lane.b32.xlu0 %v759, 127
    %v823 = vpop.permute.xlu0 %822
    %824 = vrot.lane.b32.xlu0 %v789, 127
    %v825 = vpop.permute.xlu0 %824
    %826 = vrot.lane.b32.xlu0 %v761, 127
    %v827 = vpop.permute.xlu0 %826
    %828 = vrot.lane.b32.xlu0 %v790, 127
    %v829 = vpop.permute.xlu0 %828
    %830 = vrot.lane.b32.xlu0 %v763, 127
    %v831 = vpop.permute.xlu0 %830
    %832 = vrot.lane.b32.xlu0 %v791, 127
    %v833 = vpop.permute.xlu0 %832
    %834 = vrot.lane.b32.xlu0 %v765, 127
    %v835 = vpop.permute.xlu0 %834
    %836 = vrot.lane.b32.xlu0 %v792, 127
    %v837 = vpop.permute.xlu0 %836
    %838 = vrot.lane.b32.xlu0 %v767, 127
    %v839 = vpop.permute.xlu0 %838
    %840 = vrot.lane.b32.xlu0 %v793, 127
    %v841 = vpop.permute.xlu0 %840
    %vm842 = vcmask 1039360
    %v843 = vsel %vm842, %v811, %v813
    %v844 = vsel %vm842, %v815, %v817
    %v845 = vsel %vm842, %v819, %v821
    %v846 = vsel %vm842, %v823, %v825
    %v847 = vsel %vm842, %v827, %v829
    %v848 = vsel %vm842, %v831, %v833
    %v849 = vsel %vm842, %v835, %v837
    %v850 = vsel %vm842, %v839, %v841
    %v867 = vmax.f32 %v753, %v843
    %v868 = vmax.f32 %v754, %v813
    %v869 = vmax.f32 %v755, %v844
    %v870 = vmax.f32 %v756, %v817
    %v871 = vmax.f32 %v757, %v845
    %v872 = vmax.f32 %v758, %v821
    %v873 = vmax.f32 %v759, %v846
    %v874 = vmax.f32 %v760, %v825
    %v875 = vmax.f32 %v761, %v847
    %v876 = vmax.f32 %v762, %v829
    %v877 = vmax.f32 %v763, %v848
    %v878 = vmax.f32 %v764, %v833
    %v879 = vmax.f32 %v765, %v849
    %v880 = vmax.f32 %v766, %v837
    %v881 = vmax.f32 %v767, %v850
    %v882 = vmax.f32 %v768, %v841
    %v883 = vrot.slane %v867, 1
    %v884 = vrot.slane %v868, 1
    %v885 = vrot.slane %v869, 1
    %v886 = vrot.slane %v870, 1
    %v887 = vrot.slane %v871, 1
    %v888 = vrot.slane %v872, 1
    %v889 = vrot.slane %v873, 1
    %v890 = vrot.slane %v874, 1
    %v891 = vrot.slane %v875, 1
    %v892 = vrot.slane %v876, 1
    %v893 = vrot.slane %v877, 1
    %v894 = vrot.slane %v878, 1
    %v895 = vrot.slane %v879, 1
    %v896 = vrot.slane %v880, 1
    %v897 = vrot.slane %v881, 1
    %v898 = vrot.slane %v882, 1
    %v899 = vsel %vm56, %v895, %v897
    %v900 = vsel %vm56, %v896, %v898
    %v901 = vsel %vm56, %v893, %v895
    %v902 = vsel %vm56, %v894, %v896
    %v903 = vsel %vm56, %v891, %v893
    %v904 = vsel %vm56, %v892, %v894
    %v905 = vsel %vm56, %v889, %v891
    %v906 = vsel %vm56, %v890, %v892
    %v907 = vsel %vm56, %v887, %v889
    %v908 = vsel %vm56, %v888, %v890
    %v909 = vsel %vm56, %v885, %v887
    %v910 = vsel %vm56, %v886, %v888
    %v911 = vsel %vm56, %v883, %v885
    %v912 = vsel %vm56, %v884, %v886
    %v913 = vsel %vm56, %v897, %v883
    %v914 = vsel %vm56, %v898, %v884
    %v915 = vmax.f32 %v867, %v911
    %v916 = vmax.f32 %v868, %v912
    %v917 = vmax.f32 %v869, %v909
    %v918 = vmax.f32 %v870, %v910
    %v919 = vmax.f32 %v871, %v907
    %v920 = vmax.f32 %v872, %v908
    %v921 = vmax.f32 %v873, %v905
    %v922 = vmax.f32 %v874, %v906
    %v923 = vmax.f32 %v875, %v903
    %v924 = vmax.f32 %v876, %v904
    %v925 = vmax.f32 %v877, %v901
    %v926 = vmax.f32 %v878, %v902
    %v927 = vmax.f32 %v879, %v899
    %v928 = vmax.f32 %v880, %v900
    %v929 = vmax.f32 %v881, %v913
    %v930 = vmax.f32 %v882, %v914
    %v931 = vld [vmem:[%s4] sm:$0xff]
    %v932 = vld [vmem:[%s4 + $0x8] sm:$0xff]
    %v933 = vld [vmem:[%s4 + $0x10] sm:$0xff]
    %v934 = vld [vmem:[%s4 + $0x18] sm:$0xff]
    %vm935 = vcmask 523264
    %v937 = vsel %vm935, %v931, 0
    %v940 = vsel %vm935, %v932, 0
    %v943 = vsel %vm935, %v933, 0
    %v946 = vsel %vm935, %v934, 0
    %948 = vmatpush.msra.mxu0 0.0
    %949 = vmatpush.msra.mxu0 0.0
    %950 = vmatpush.msra.mxu0 0.0
    %951 = vmatpush.msra.mxu0 0.0
    %952 = vmatpush.msra.mxu0 0.0
    %953 = vmatpush.msra.mxu0 0.0
    %954 = vmatpush.msra.mxu0 0.0
    %955 = vmatpush.msra.mxu0 0.0
    %956 = vmatpush.msra.mxu0 %v929
    %957 = vmatpush.msra.mxu0 %v927
    %958 = vmatpush.msra.mxu0 %v925
    %959 = vmatpush.msra.mxu0 %v923
    %960 = vmatpush.msra.mxu0 %v921
    %961 = vmatpush.msra.mxu0 %v919
    %962 = vmatpush.msra.mxu0 %v917
    %963 = vmatpush.msra.mxu0 %v915
    %964 = vmatmul.f32.gmra.mxu0 %v937
    %v965 = vpop.f32.mrf.mxu0
    %v966 = vadd.f32 0.0, %v965
    %967 = vmatmul.f32.gmra.mxu0 %v940
    %v968 = vpop.f32.mrf.mxu0
    %v969 = vadd.f32 0.0, %v968
    %970 = vmatmul.f32.gmra.mxu0 %v943
    %v971 = vpop.f32.mrf.mxu0
    %v972 = vadd.f32 0.0, %v971
    %973 = vmatmul.f32.gmra.mxu0 %v946
    %v974 = vpop.f32.mrf.mxu0
    %v975 = vadd.f32 0.0, %v974
    %976 = vdwg.mxu0
    %977 = vmatpush.msra.mxu0 0.0
    %978 = vmatpush.msra.mxu0 0.0
    %979 = vmatpush.msra.mxu0 0.0
    %980 = vmatpush.msra.mxu0 0.0
    %981 = vmatpush.msra.mxu0 0.0
    %982 = vmatpush.msra.mxu0 0.0
    %983 = vmatpush.msra.mxu0 0.0
    %984 = vmatpush.msra.mxu0 0.0
    %985 = vmatpush.msra.mxu0 %v930
    %986 = vmatpush.msra.mxu0 %v928
    %987 = vmatpush.msra.mxu0 %v926
    %988 = vmatpush.msra.mxu0 %v924
    %989 = vmatpush.msra.mxu0 %v922
    %990 = vmatpush.msra.mxu0 %v920
    %991 = vmatpush.msra.mxu0 %v918
    %992 = vmatpush.msra.mxu0 %v916
    %993 = vmatmul.f32.gmra.mxu0 %v937
    %v994 = vpop.f32.mrf.mxu0
    %v995 = vadd.f32 0.0, %v994
    %996 = vmatmul.f32.gmra.mxu0 %v940
    %v997 = vpop.f32.mrf.mxu0
    %v998 = vadd.f32 0.0, %v997
    %999 = vmatmul.f32.gmra.mxu0 %v943
    %v1000 = vpop.f32.mrf.mxu0
    %v1001 = vadd.f32 0.0, %v1000
    %1002 = vmatmul.f32.gmra.mxu0 %v946
    %v1003 = vpop.f32.mrf.mxu0
    %v1004 = vadd.f32 0.0, %v1003
    %1005 = vdwg.mxu0
    %v1006 = vld [vmem:[%s2] sm:$0xff]
    %v1007 = vld [vmem:[%s2 + $0x8] sm:$0xff]
    %v1008 = vld [vmem:[%s2 + $0x10] sm:$0xff]
    %v1009 = vld [vmem:[%s2 + $0x18] sm:$0xff]
    %v1010 = vld [vmem:[%s2 + $0x20] sm:$0xff]
    %v1011 = vld [vmem:[%s2 + $0x28] sm:$0xff]
    %v1012 = vld [vmem:[%s2 + $0x30] sm:$0xff]
    %v1013 = vld [vmem:[%s2 + $0x38] sm:$0xff]
    %v1014 = vld [vmem:[%s2 + $0x40] sm:$0xff]
    %v1015 = vld [vmem:[%s2 + $0x48] sm:$0xff]
    %v1016 = vld [vmem:[%s2 + $0x50] sm:$0xff]
    %v1017 = vld [vmem:[%s2 + $0x58] sm:$0xff]
    %v1018 = vld [vmem:[%s2 + $0x60] sm:$0xff]
    %v1019 = vld [vmem:[%s2 + $0x68] sm:$0xff]
    %v1020 = vld [vmem:[%s2 + $0x70] sm:$0xff]
    %v1021 = vld [vmem:[%s2 + $0x78] sm:$0xff]
    %v1022 = vld [vmem:[%s2 + $0x80] sm:$0xff]
    %v1023 = vld [vmem:[%s2 + $0x88] sm:$0xff]
    %v1024 = vld [vmem:[%s2 + $0x90] sm:$0xff]
    %v1025 = vld [vmem:[%s2 + $0x98] sm:$0xff]
    %v1026 = vld [vmem:[%s2 + $0xa0] sm:$0xff]
    %v1027 = vld [vmem:[%s2 + $0xa8] sm:$0xff]
    %v1028 = vld [vmem:[%s2 + $0xb0] sm:$0xff]
    %v1029 = vld [vmem:[%s2 + $0xb8] sm:$0xff]
    %v1030 = vld [vmem:[%s2 + $0xc0] sm:$0xff]
    %v1031 = vld [vmem:[%s2 + $0xc8] sm:$0xff]
    %v1032 = vld [vmem:[%s2 + $0xd0] sm:$0xff]
    %v1033 = vld [vmem:[%s2 + $0xd8] sm:$0xff]
    %v1034 = vld [vmem:[%s2 + $0xe0] sm:$0xff]
    %v1035 = vld [vmem:[%s2 + $0xe8] sm:$0xff]
    %v1036 = vld [vmem:[%s2 + $0xf0] sm:$0xff]
    %v1037 = vld [vmem:[%s2 + $0xf8] sm:$0xff]
    %v1038 = vld [vmem:[%s2 + $0x100] sm:$0xff]
    %v1039 = vld [vmem:[%s2 + $0x108] sm:$0xff]
    %v1040 = vld [vmem:[%s2 + $0x110] sm:$0xff]
    %v1041 = vld [vmem:[%s2 + $0x118] sm:$0xff]
    %v1042 = vld [vmem:[%s2 + $0x120] sm:$0xff]
    %v1043 = vld [vmem:[%s2 + $0x128] sm:$0xff]
    %v1044 = vld [vmem:[%s2 + $0x130] sm:$0xff]
    %v1045 = vld [vmem:[%s2 + $0x138] sm:$0xff]
    %v1046 = vld [vmem:[%s2 + $0x140] sm:$0xff]
    %v1047 = vld [vmem:[%s2 + $0x148] sm:$0xff]
    %v1048 = vrot.slane %v966, 1
    %v1049 = vrot.slane %v995, 1
    %v1050 = vrot.slane %v969, 1
    %v1051 = vrot.slane %v998, 1
    %v1052 = vrot.slane %v972, 1
    %v1053 = vrot.slane %v1001, 1
    %v1054 = vrot.slane %v975, 1
    %v1055 = vrot.slane %v1004, 1
    %v1056 = vsel %vm56, %v1052, %v1054
    %v1057 = vsel %vm56, %v1053, %v1055
    %v1058 = vsel %vm56, %v1050, %v1052
    %v1059 = vsel %vm56, %v1051, %v1053
    %v1060 = vsel %vm56, %v1048, %v1050
    %v1061 = vsel %vm56, %v1049, %v1051
    %v1062 = vsel %vm56, %v1054, %v1048
    %v1063 = vsel %vm56, %v1055, %v1049
    %s1064 = scalar_lea.vmem %s2, 336
    %v1065 = vld [vmem:[%s1064] sm:$0xff]
    %v1066 = vld [vmem:[%s1064 + $0x8] sm:$0xff]
    %v1067 = vld [vmem:[%s1064 + $0x10] sm:$0xff]
    %v1068 = vld [vmem:[%s1064 + $0x18] sm:$0xff]
    %v1069 = vld [vmem:[%s1064 + $0x20] sm:$0xff]
    %v1070 = vld [vmem:[%s1064 + $0x28] sm:$0xff]
    %v1071 = vld [vmem:[%s1064 + $0x30] sm:$0xff]
    %v1072 = vld [vmem:[%s1064 + $0x38] sm:$0xff]
    %v1073 = vld [vmem:[%s1064 + $0x40] sm:$0xff]
    %v1074 = vld [vmem:[%s1064 + $0x48] sm:$0xff]
    %v1075 = vld [vmem:[%s1064 + $0x50] sm:$0xff]
    %v1076 = vld [vmem:[%s1064 + $0x58] sm:$0xff]
    %v1077 = vld [vmem:[%s1064 + $0x60] sm:$0xff]
    %v1078 = vld [vmem:[%s1064 + $0x68] sm:$0xff]
    %v1079 = vld [vmem:[%s1064 + $0x70] sm:$0xff]
    %v1080 = vld [vmem:[%s1064 + $0x78] sm:$0xff]
    %v1081 = vld [vmem:[%s1064 + $0x80] sm:$0xff]
    %v1082 = vld [vmem:[%s1064 + $0x88] sm:$0xff]
    %v1083 = vld [vmem:[%s1064 + $0x90] sm:$0xff]
    %v1084 = vld [vmem:[%s1064 + $0x98] sm:$0xff]
    %v1085 = vld [vmem:[%s1064 + $0xa0] sm:$0xff]
    %v1086 = vld [vmem:[%s1064 + $0xa8] sm:$0xff]
    %v1087 = vld [vmem:[%s1064 + $0xb0] sm:$0xff]
    %v1088 = vld [vmem:[%s1064 + $0xb8] sm:$0xff]
    %v1089 = vld [vmem:[%s1064 + $0xc0] sm:$0xff]
    %v1090 = vld [vmem:[%s1064 + $0xc8] sm:$0xff]
    %v1091 = vld [vmem:[%s1064 + $0xd0] sm:$0xff]
    %v1092 = vld [vmem:[%s1064 + $0xd8] sm:$0xff]
    %v1093 = vld [vmem:[%s1064 + $0xe0] sm:$0xff]
    %v1094 = vld [vmem:[%s1064 + $0xe8] sm:$0xff]
    %v1095 = vld [vmem:[%s1064 + $0xf0] sm:$0xff]
    %v1096 = vld [vmem:[%s1064 + $0xf8] sm:$0xff]
    %v1097 = vld [vmem:[%s1064 + $0x100] sm:$0xff]
    %v1098 = vld [vmem:[%s1064 + $0x108] sm:$0xff]
    %v1099 = vld [vmem:[%s1064 + $0x110] sm:$0xff]
    %v1100 = vld [vmem:[%s1064 + $0x118] sm:$0xff]
    %v1101 = vld [vmem:[%s1064 + $0x120] sm:$0xff]
    %v1102 = vld [vmem:[%s1064 + $0x128] sm:$0xff]
    %v1103 = vld [vmem:[%s1064 + $0x130] sm:$0xff]
    %v1104 = vld [vmem:[%s1064 + $0x138] sm:$0xff]
    %v1105 = vld [vmem:[%s1064 + $0x140] sm:$0xff]
    %v1106 = vld [vmem:[%s1064 + $0x148] sm:$0xff]
    %vm1107 = vcmask 326656
    %v1109 = vsel %vm1107, %v1061, 0
    %v1112 = vsel %vm1107, %v1059, 0
    %v1115 = vsel %vm1107, %v1057, 0
    %v1118 = vsel %vm1107, %v1063, 0
    %1120 = vmatpush.msra.mxu0 %v1095
    %1121 = vmatpush.msra.mxu0 %v1093
    %1122 = vmatpush.msra.mxu0 %v1091
    %1123 = vmatpush.msra.mxu0 %v1089
    %1124 = vmatpush.msra.mxu0 %v1087
    %1125 = vmatpush.msra.mxu0 %v1085
    %1126 = vmatpush.msra.mxu0 %v1083
    %1127 = vmatpush.msra.mxu0 %v1081
    %1128 = vmatpush.msra.mxu0 %v1079
    %1129 = vmatpush.msra.mxu0 %v1077
    %1130 = vmatpush.msra.mxu0 %v1075
    %1131 = vmatpush.msra.mxu0 %v1073
    %1132 = vmatpush.msra.mxu0 %v1071
    %1133 = vmatpush.msra.mxu0 %v1069
    %1134 = vmatpush.msra.mxu0 %v1067
    %1135 = vmatpush.msra.mxu0 %v1065
    %1136 = vmatmul.f32.gmra.mxu0 %v1060
    %v1137 = vpop.f32.mrf.mxu0
    %v1138 = vadd.f32 0.0, %v1137
    %1139 = vmatmul.f32.gmra.mxu0 %v1058
    %v1140 = vpop.f32.mrf.mxu0
    %v1141 = vadd.f32 0.0, %v1140
    %1142 = vmatmul.f32.gmra.mxu0 %v1056
    %v1143 = vpop.f32.mrf.mxu0
    %v1144 = vadd.f32 0.0, %v1143
    %1145 = vmatmul.f32.gmra.mxu0 %v1062
    %v1146 = vpop.f32.mrf.mxu0
    %v1147 = vadd.f32 0.0, %v1146
    %1148 = vdwg.mxu0
    %1149 = vmatpush.msra.mxu0 0.0
    %1150 = vmatpush.msra.mxu0 0.0
    %1151 = vmatpush.msra.mxu0 0.0
    %1152 = vmatpush.msra.mxu0 0.0
    %1153 = vmatpush.msra.mxu0 0.0
    %1154 = vmatpush.msra.mxu0 0.0
    %1155 = vmatpush.msra.mxu0 0.0
    %1156 = vmatpush.msra.mxu0 0.0
    %1157 = vmatpush.msra.mxu0 0.0
    %1158 = vmatpush.msra.mxu0 0.0
    %1159 = vmatpush.msra.mxu0 0.0
    %1160 = vmatpush.msra.mxu0 %v1105
    %1161 = vmatpush.msra.mxu0 %v1103
    %1162 = vmatpush.msra.mxu0 %v1101
    %1163 = vmatpush.msra.mxu0 %v1099
    %1164 = vmatpush.msra.mxu0 %v1097
    %1165 = vmatmul.f32.gmra.mxu0 %v1109
    %v1166 = vpop.f32.mrf.mxu0
    %v1167 = vadd.f32 %v1138, %v1166
    %1168 = vmatmul.f32.gmra.mxu0 %v1112
    %v1169 = vpop.f32.mrf.mxu0
    %v1170 = vadd.f32 %v1141, %v1169
    %1171 = vmatmul.f32.gmra.mxu0 %v1115
    %v1172 = vpop.f32.mrf.mxu0
    %v1173 = vadd.f32 %v1144, %v1172
    %1174 = vmatmul.f32.gmra.mxu0 %v1118
    %v1175 = vpop.f32.mrf.mxu0
    %v1176 = vadd.f32 %v1147, %v1175
    %1177 = vdwg.mxu0
    %1178 = vmatpush.msra.mxu0 %v1096
    %1179 = vmatpush.msra.mxu0 %v1094
    %1180 = vmatpush.msra.mxu0 %v1092
    %1181 = vmatpush.msra.mxu0 %v1090
    %1182 = vmatpush.msra.mxu0 %v1088
    %1183 = vmatpush.msra.mxu0 %v1086
    %1184 = vmatpush.msra.mxu0 %v1084
    %1185 = vmatpush.msra.mxu0 %v1082
    %1186 = vmatpush.msra.mxu0 %v1080
    %1187 = vmatpush.msra.mxu0 %v1078
    %1188 = vmatpush.msra.mxu0 %v1076
    %1189 = vmatpush.msra.mxu0 %v1074
    %1190 = vmatpush.msra.mxu0 %v1072
    %1191 = vmatpush.msra.mxu0 %v1070
    %1192 = vmatpush.msra.mxu0 %v1068
    %1193 = vmatpush.msra.mxu0 %v1066
    %1194 = vmatmul.f32.gmra.mxu0 %v1060
    %v1195 = vpop.f32.mrf.mxu0
    %v1196 = vadd.f32 0.0, %v1195
    %1197 = vmatmul.f32.gmra.mxu0 %v1058
    %v1198 = vpop.f32.mrf.mxu0
    %v1199 = vadd.f32 0.0, %v1198
    %1200 = vmatmul.f32.gmra.mxu0 %v1056
    %v1201 = vpop.f32.mrf.mxu0
    %v1202 = vadd.f32 0.0, %v1201
    %1203 = vmatmul.f32.gmra.mxu0 %v1062
    %v1204 = vpop.f32.mrf.mxu0
    %v1205 = vadd.f32 0.0, %v1204
    %1206 = vdwg.mxu0
    %1207 = vmatpush.msra.mxu0 0.0
    %1208 = vmatpush.msra.mxu0 0.0
    %1209 = vmatpush.msra.mxu0 0.0
    %1210 = vmatpush.msra.mxu0 0.0
    %1211 = vmatpush.msra.mxu0 0.0
    %1212 = vmatpush.msra.mxu0 0.0
    %1213 = vmatpush.msra.mxu0 0.0
    %1214 = vmatpush.msra.mxu0 0.0
    %1215 = vmatpush.msra.mxu0 0.0
    %1216 = vmatpush.msra.mxu0 0.0
    %1217 = vmatpush.msra.mxu0 0.0
    %1218 = vmatpush.msra.mxu0 %v1106
    %1219 = vmatpush.msra.mxu0 %v1104
    %1220 = vmatpush.msra.mxu0 %v1102
    %1221 = vmatpush.msra.mxu0 %v1100
    %1222 = vmatpush.msra.mxu0 %v1098
    %1223 = vmatmul.f32.gmra.mxu0 %v1109
    %v1224 = vpop.f32.mrf.mxu0
    %v1225 = vadd.f32 %v1196, %v1224
    %1226 = vmatmul.f32.gmra.mxu0 %v1112
    %v1227 = vpop.f32.mrf.mxu0
    %v1228 = vadd.f32 %v1199, %v1227
    %1229 = vmatmul.f32.gmra.mxu0 %v1115
    %v1230 = vpop.f32.mrf.mxu0
    %v1231 = vadd.f32 %v1202, %v1230
    %1232 = vmatmul.f32.gmra.mxu0 %v1118
    %v1233 = vpop.f32.mrf.mxu0
    %v1234 = vadd.f32 %v1205, %v1233
    %1235 = vdwg.mxu0
    %v1237 = vsel %vm1107, %v995, 0
    %v1240 = vsel %vm1107, %v998, 0
    %v1243 = vsel %vm1107, %v1001, 0
    %v1246 = vsel %vm1107, %v1004, 0
    %1248 = vmatpush.msra.mxu0 %v1036
    %1249 = vmatpush.msra.mxu0 %v1034
    %1250 = vmatpush.msra.mxu0 %v1032
    %1251 = vmatpush.msra.mxu0 %v1030
    %1252 = vmatpush.msra.mxu0 %v1028
    %1253 = vmatpush.msra.mxu0 %v1026
    %1254 = vmatpush.msra.mxu0 %v1024
    %1255 = vmatpush.msra.mxu0 %v1022
    %1256 = vmatpush.msra.mxu0 %v1020
    %1257 = vmatpush.msra.mxu0 %v1018
    %1258 = vmatpush.msra.mxu0 %v1016
    %1259 = vmatpush.msra.mxu0 %v1014
    %1260 = vmatpush.msra.mxu0 %v1012
    %1261 = vmatpush.msra.mxu0 %v1010
    %1262 = vmatpush.msra.mxu0 %v1008
    %1263 = vmatpush.msra.mxu0 %v1006
    %1264 = vmatmul.f32.gmra.mxu0 %v966
    %v1265 = vpop.f32.mrf.mxu0
    %v1266 = vadd.f32 %v1167, %v1265
    %1267 = vmatmul.f32.gmra.mxu0 %v969
    %v1268 = vpop.f32.mrf.mxu0
    %v1269 = vadd.f32 %v1170, %v1268
    %1270 = vmatmul.f32.gmra.mxu0 %v972
    %v1271 = vpop.f32.mrf.mxu0
    %v1272 = vadd.f32 %v1173, %v1271
    %1273 = vmatmul.f32.gmra.mxu0 %v975
    %v1274 = vpop.f32.mrf.mxu0
    %v1275 = vadd.f32 %v1176, %v1274
    %1276 = vdwg.mxu0
    %1277 = vmatpush.msra.mxu0 0.0
    %1278 = vmatpush.msra.mxu0 0.0
    %1279 = vmatpush.msra.mxu0 0.0
    %1280 = vmatpush.msra.mxu0 0.0
    %1281 = vmatpush.msra.mxu0 0.0
    %1282 = vmatpush.msra.mxu0 0.0
    %1283 = vmatpush.msra.mxu0 0.0
    %1284 = vmatpush.msra.mxu0 0.0
    %1285 = vmatpush.msra.mxu0 0.0
    %1286 = vmatpush.msra.mxu0 0.0
    %1287 = vmatpush.msra.mxu0 0.0
    %1288 = vmatpush.msra.mxu0 %v1046
    %1289 = vmatpush.msra.mxu0 %v1044
    %1290 = vmatpush.msra.mxu0 %v1042
    %1291 = vmatpush.msra.mxu0 %v1040
    %1292 = vmatpush.msra.mxu0 %v1038
    %1293 = vmatmul.f32.gmra.mxu0 %v1237
    %v1294 = vpop.f32.mrf.mxu0
    %v1295 = vadd.f32 %v1266, %v1294
    %1296 = vmatmul.f32.gmra.mxu0 %v1240
    %v1297 = vpop.f32.mrf.mxu0
    %v1298 = vadd.f32 %v1269, %v1297
    %1299 = vmatmul.f32.gmra.mxu0 %v1243
    %v1300 = vpop.f32.mrf.mxu0
    %v1301 = vadd.f32 %v1272, %v1300
    %1302 = vmatmul.f32.gmra.mxu0 %v1246
    %v1303 = vpop.f32.mrf.mxu0
    %v1304 = vadd.f32 %v1275, %v1303
    %1305 = vdwg.mxu0
    %1306 = vmatpush.msra.mxu0 %v1037
    %1307 = vmatpush.msra.mxu0 %v1035
    %1308 = vmatpush.msra.mxu0 %v1033
    %1309 = vmatpush.msra.mxu0 %v1031
    %1310 = vmatpush.msra.mxu0 %v1029
    %1311 = vmatpush.msra.mxu0 %v1027
    %1312 = vmatpush.msra.mxu0 %v1025
    %1313 = vmatpush.msra.mxu0 %v1023
    %1314 = vmatpush.msra.mxu0 %v1021
    %1315 = vmatpush.msra.mxu0 %v1019
    %1316 = vmatpush.msra.mxu0 %v1017
    %1317 = vmatpush.msra.mxu0 %v1015
    %1318 = vmatpush.msra.mxu0 %v1013
    %1319 = vmatpush.msra.mxu0 %v1011
    %1320 = vmatpush.msra.mxu0 %v1009
    %1321 = vmatpush.msra.mxu0 %v1007
    %1322 = vmatmul.f32.gmra.mxu0 %v966
    %v1323 = vpop.f32.mrf.mxu0
    %v1324 = vadd.f32 %v1225, %v1323
    %1325 = vmatmul.f32.gmra.mxu0 %v969
    %v1326 = vpop.f32.mrf.mxu0
    %v1327 = vadd.f32 %v1228, %v1326
    %1328 = vmatmul.f32.gmra.mxu0 %v972
    %v1329 = vpop.f32.mrf.mxu0
    %v1330 = vadd.f32 %v1231, %v1329
    %1331 = vmatmul.f32.gmra.mxu0 %v975
    %v1332 = vpop.f32.mrf.mxu0
    %v1333 = vadd.f32 %v1234, %v1332
    %1334 = vdwg.mxu0
    %1335 = vmatpush.msra.mxu0 0.0
    %1336 = vmatpush.msra.mxu0 0.0
    %1337 = vmatpush.msra.mxu0 0.0
    %1338 = vmatpush.msra.mxu0 0.0
    %1339 = vmatpush.msra.mxu0 0.0
    %1340 = vmatpush.msra.mxu0 0.0
    %1341 = vmatpush.msra.mxu0 0.0
    %1342 = vmatpush.msra.mxu0 0.0
    %1343 = vmatpush.msra.mxu0 0.0
    %1344 = vmatpush.msra.mxu0 0.0
    %1345 = vmatpush.msra.mxu0 0.0
    %1346 = vmatpush.msra.mxu0 %v1047
    %1347 = vmatpush.msra.mxu0 %v1045
    %1348 = vmatpush.msra.mxu0 %v1043
    %1349 = vmatpush.msra.mxu0 %v1041
    %1350 = vmatpush.msra.mxu0 %v1039
    %1351 = vmatmul.f32.gmra.mxu0 %v1237
    %v1352 = vpop.f32.mrf.mxu0
    %v1353 = vadd.f32 %v1324, %v1352
    %1354 = vmatmul.f32.gmra.mxu0 %v1240
    %v1355 = vpop.f32.mrf.mxu0
    %v1356 = vadd.f32 %v1327, %v1355
    %1357 = vmatmul.f32.gmra.mxu0 %v1243
    %v1358 = vpop.f32.mrf.mxu0
    %v1359 = vadd.f32 %v1330, %v1358
    %1360 = vmatmul.f32.gmra.mxu0 %v1246
    %v1361 = vpop.f32.mrf.mxu0
    %v1362 = vadd.f32 %v1333, %v1361
    %1363 = vdwg.mxu0
    %v1364 = vrot.slane %v966, 2
    %v1365 = vrot.slane %v995, 2
    %v1366 = vrot.slane %v969, 2
    %v1367 = vrot.slane %v998, 2
    %v1368 = vrot.slane %v972, 2
    %v1369 = vrot.slane %v1001, 2
    %v1370 = vrot.slane %v975, 2
    %v1371 = vrot.slane %v1004, 2
    %v1372 = vsel %vm295, %v1368, %v1370
    %v1373 = vsel %vm295, %v1369, %v1371
    %v1374 = vsel %vm295, %v1366, %v1368
    %v1375 = vsel %vm295, %v1367, %v1369
    %v1376 = vsel %vm295, %v1364, %v1366
    %v1377 = vsel %vm295, %v1365, %v1367
    %v1378 = vsel %vm295, %v1370, %v1364
    %v1379 = vsel %vm295, %v1371, %v1365
    %s1380 = scalar_lea.vmem %s2, 672
    %v1381 = vld [vmem:[%s1380] sm:$0xff]
    %v1382 = vld [vmem:[%s1380 + $0x8] sm:$0xff]
    %v1383 = vld [vmem:[%s1380 + $0x10] sm:$0xff]
    %v1384 = vld [vmem:[%s1380 + $0x18] sm:$0xff]
    %v1385 = vld [vmem:[%s1380 + $0x20] sm:$0xff]
    %v1386 = vld [vmem:[%s1380 + $0x28] sm:$0xff]
    %v1387 = vld [vmem:[%s1380 + $0x30] sm:$0xff]
    %v1388 = vld [vmem:[%s1380 + $0x38] sm:$0xff]
    %v1389 = vld [vmem:[%s1380 + $0x40] sm:$0xff]
    %v1390 = vld [vmem:[%s1380 + $0x48] sm:$0xff]
    %v1391 = vld [vmem:[%s1380 + $0x50] sm:$0xff]
    %v1392 = vld [vmem:[%s1380 + $0x58] sm:$0xff]
    %v1393 = vld [vmem:[%s1380 + $0x60] sm:$0xff]
    %v1394 = vld [vmem:[%s1380 + $0x68] sm:$0xff]
    %v1395 = vld [vmem:[%s1380 + $0x70] sm:$0xff]
    %v1396 = vld [vmem:[%s1380 + $0x78] sm:$0xff]
    %v1397 = vld [vmem:[%s1380 + $0x80] sm:$0xff]
    %v1398 = vld [vmem:[%s1380 + $0x88] sm:$0xff]
    %v1399 = vld [vmem:[%s1380 + $0x90] sm:$0xff]
    %v1400 = vld [vmem:[%s1380 + $0x98] sm:$0xff]
    %v1401 = vld [vmem:[%s1380 + $0xa0] sm:$0xff]
    %v1402 = vld [vmem:[%s1380 + $0xa8] sm:$0xff]
    %v1403 = vld [vmem:[%s1380 + $0xb0] sm:$0xff]
    %v1404 = vld [vmem:[%s1380 + $0xb8] sm:$0xff]
    %v1405 = vld [vmem:[%s1380 + $0xc0] sm:$0xff]
    %v1406 = vld [vmem:[%s1380 + $0xc8] sm:$0xff]
    %v1407 = vld [vmem:[%s1380 + $0xd0] sm:$0xff]
    %v1408 = vld [vmem:[%s1380 + $0xd8] sm:$0xff]
    %v1409 = vld [vmem:[%s1380 + $0xe0] sm:$0xff]
    %v1410 = vld [vmem:[%s1380 + $0xe8] sm:$0xff]
    %v1411 = vld [vmem:[%s1380 + $0xf0] sm:$0xff]
    %v1412 = vld [vmem:[%s1380 + $0xf8] sm:$0xff]
    %v1413 = vld [vmem:[%s1380 + $0x100] sm:$0xff]
    %v1414 = vld [vmem:[%s1380 + $0x108] sm:$0xff]
    %v1415 = vld [vmem:[%s1380 + $0x110] sm:$0xff]
    %v1416 = vld [vmem:[%s1380 + $0x118] sm:$0xff]
    %v1417 = vld [vmem:[%s1380 + $0x120] sm:$0xff]
    %v1418 = vld [vmem:[%s1380 + $0x128] sm:$0xff]
    %v1419 = vld [vmem:[%s1380 + $0x130] sm:$0xff]
    %v1420 = vld [vmem:[%s1380 + $0x138] sm:$0xff]
    %v1421 = vld [vmem:[%s1380 + $0x140] sm:$0xff]
    %v1422 = vld [vmem:[%s1380 + $0x148] sm:$0xff]
    %v1424 = vsel %vm1107, %v1377, 0
    %v1427 = vsel %vm1107, %v1375, 0
    %v1430 = vsel %vm1107, %v1373, 0
    %v1433 = vsel %vm1107, %v1379, 0
    %1435 = vmatpush.msra.mxu0 %v1411
    %1436 = vmatpush.msra.mxu0 %v1409
    %1437 = vmatpush.msra.mxu0 %v1407
    %1438 = vmatpush.msra.mxu0 %v1405
    %1439 = vmatpush.msra.mxu0 %v1403
    %1440 = vmatpush.msra.mxu0 %v1401
    %1441 = vmatpush.msra.mxu0 %v1399
    %1442 = vmatpush.msra.mxu0 %v1397
    %1443 = vmatpush.msra.mxu0 %v1395
    %1444 = vmatpush.msra.mxu0 %v1393
    %1445 = vmatpush.msra.mxu0 %v1391
    %1446 = vmatpush.msra.mxu0 %v1389
    %1447 = vmatpush.msra.mxu0 %v1387
    %1448 = vmatpush.msra.mxu0 %v1385
    %1449 = vmatpush.msra.mxu0 %v1383
    %1450 = vmatpush.msra.mxu0 %v1381
    %1451 = vmatmul.f32.gmra.mxu0 %v1376
    %v1452 = vpop.f32.mrf.mxu0
    %v1453 = vadd.f32 0.0, %v1452
    %1454 = vmatmul.f32.gmra.mxu0 %v1374
    %v1455 = vpop.f32.mrf.mxu0
    %v1456 = vadd.f32 0.0, %v1455
    %1457 = vmatmul.f32.gmra.mxu0 %v1372
    %v1458 = vpop.f32.mrf.mxu0
    %v1459 = vadd.f32 0.0, %v1458
    %1460 = vmatmul.f32.gmra.mxu0 %v1378
    %v1461 = vpop.f32.mrf.mxu0
    %v1462 = vadd.f32 0.0, %v1461
    %1463 = vdwg.mxu0
    %1464 = vmatpush.msra.mxu0 0.0
    %1465 = vmatpush.msra.mxu0 0.0
    %1466 = vmatpush.msra.mxu0 0.0
    %1467 = vmatpush.msra.mxu0 0.0
    %1468 = vmatpush.msra.mxu0 0.0
    %1469 = vmatpush.msra.mxu0 0.0
    %1470 = vmatpush.msra.mxu0 0.0
    %1471 = vmatpush.msra.mxu0 0.0
    %1472 = vmatpush.msra.mxu0 0.0
    %1473 = vmatpush.msra.mxu0 0.0
    %1474 = vmatpush.msra.mxu0 0.0
    %1475 = vmatpush.msra.mxu0 %v1421
    %1476 = vmatpush.msra.mxu0 %v1419
    %1477 = vmatpush.msra.mxu0 %v1417
    %1478 = vmatpush.msra.mxu0 %v1415
    %1479 = vmatpush.msra.mxu0 %v1413
    %1480 = vmatmul.f32.gmra.mxu0 %v1424
    %v1481 = vpop.f32.mrf.mxu0
    %v1482 = vadd.f32 %v1453, %v1481
    %1483 = vmatmul.f32.gmra.mxu0 %v1427
    %v1484 = vpop.f32.mrf.mxu0
    %v1485 = vadd.f32 %v1456, %v1484
    %1486 = vmatmul.f32.gmra.mxu0 %v1430
    %v1487 = vpop.f32.mrf.mxu0
    %v1488 = vadd.f32 %v1459, %v1487
    %1489 = vmatmul.f32.gmra.mxu0 %v1433
    %v1490 = vpop.f32.mrf.mxu0
    %v1491 = vadd.f32 %v1462, %v1490
    %1492 = vdwg.mxu0
    %1493 = vmatpush.msra.mxu0 %v1412
    %1494 = vmatpush.msra.mxu0 %v1410
    %1495 = vmatpush.msra.mxu0 %v1408
    %1496 = vmatpush.msra.mxu0 %v1406
    %1497 = vmatpush.msra.mxu0 %v1404
    %1498 = vmatpush.msra.mxu0 %v1402
    %1499 = vmatpush.msra.mxu0 %v1400
    %1500 = vmatpush.msra.mxu0 %v1398
    %1501 = vmatpush.msra.mxu0 %v1396
    %1502 = vmatpush.msra.mxu0 %v1394
    %1503 = vmatpush.msra.mxu0 %v1392
    %1504 = vmatpush.msra.mxu0 %v1390
    %1505 = vmatpush.msra.mxu0 %v1388
    %1506 = vmatpush.msra.mxu0 %v1386
    %1507 = vmatpush.msra.mxu0 %v1384
    %1508 = vmatpush.msra.mxu0 %v1382
    %1509 = vmatmul.f32.gmra.mxu0 %v1376
    %v1510 = vpop.f32.mrf.mxu0
    %v1511 = vadd.f32 0.0, %v1510
    %1512 = vmatmul.f32.gmra.mxu0 %v1374
    %v1513 = vpop.f32.mrf.mxu0
    %v1514 = vadd.f32 0.0, %v1513
    %1515 = vmatmul.f32.gmra.mxu0 %v1372
    %v1516 = vpop.f32.mrf.mxu0
    %v1517 = vadd.f32 0.0, %v1516
    %1518 = vmatmul.f32.gmra.mxu0 %v1378
    %v1519 = vpop.f32.mrf.mxu0
    %v1520 = vadd.f32 0.0, %v1519
    %1521 = vdwg.mxu0
    %1522 = vmatpush.msra.mxu0 0.0
    %1523 = vmatpush.msra.mxu0 0.0
    %1524 = vmatpush.msra.mxu0 0.0
    %1525 = vmatpush.msra.mxu0 0.0
    %1526 = vmatpush.msra.mxu0 0.0
    %1527 = vmatpush.msra.mxu0 0.0
    %1528 = vmatpush.msra.mxu0 0.0
    %1529 = vmatpush.msra.mxu0 0.0
    %1530 = vmatpush.msra.mxu0 0.0
    %1531 = vmatpush.msra.mxu0 0.0
    %1532 = vmatpush.msra.mxu0 0.0
    %1533 = vmatpush.msra.mxu0 %v1422
    %1534 = vmatpush.msra.mxu0 %v1420
    %1535 = vmatpush.msra.mxu0 %v1418
    %1536 = vmatpush.msra.mxu0 %v1416
    %1537 = vmatpush.msra.mxu0 %v1414
    %1538 = vmatmul.f32.gmra.mxu0 %v1424
    %v1539 = vpop.f32.mrf.mxu0
    %v1540 = vadd.f32 %v1511, %v1539
    %1541 = vmatmul.f32.gmra.mxu0 %v1427
    %v1542 = vpop.f32.mrf.mxu0
    %v1543 = vadd.f32 %v1514, %v1542
    %1544 = vmatmul.f32.gmra.mxu0 %v1430
    %v1545 = vpop.f32.mrf.mxu0
    %v1546 = vadd.f32 %v1517, %v1545
    %1547 = vmatmul.f32.gmra.mxu0 %v1433
    %v1548 = vpop.f32.mrf.mxu0
    %v1549 = vadd.f32 %v1520, %v1548
    %1550 = vdwg.mxu0
    %v1551 = vadd.f32 %v1295, %v1482
    %v1552 = vadd.f32 %v1353, %v1540
    %v1553 = vadd.f32 %v1298, %v1485
    %v1554 = vadd.f32 %v1356, %v1543
    %v1555 = vadd.f32 %v1301, %v1488
    %v1556 = vadd.f32 %v1359, %v1546
    %v1557 = vadd.f32 %v1304, %v1491
    %v1558 = vadd.f32 %v1362, %v1549
    %v1559 = vrot.slane %v966, 3
    %v1560 = vrot.slane %v995, 3
    %v1561 = vrot.slane %v969, 3
    %v1562 = vrot.slane %v998, 3
    %v1563 = vrot.slane %v972, 3
    %v1564 = vrot.slane %v1001, 3
    %v1565 = vrot.slane %v975, 3
    %v1566 = vrot.slane %v1004, 3
    %v1567 = vsel %vm443, %v1563, %v1565
    %v1568 = vsel %vm443, %v1564, %v1566
    %v1569 = vsel %vm443, %v1561, %v1563
    %v1570 = vsel %vm443, %v1562, %v1564
    %v1571 = vsel %vm443, %v1559, %v1561
    %v1572 = vsel %vm443, %v1560, %v1562
    %v1573 = vsel %vm443, %v1565, %v1559
    %v1574 = vsel %vm443, %v1566, %v1560
    %s1575 = scalar_lea.vmem %s2, 1008
    %v1576 = vld [vmem:[%s1575] sm:$0xff]
    %v1577 = vld [vmem:[%s1575 + $0x8] sm:$0xff]
    %v1578 = vld [vmem:[%s1575 + $0x10] sm:$0xff]
    %v1579 = vld [vmem:[%s1575 + $0x18] sm:$0xff]
    %v1580 = vld [vmem:[%s1575 + $0x20] sm:$0xff]
    %v1581 = vld [vmem:[%s1575 + $0x28] sm:$0xff]
    %v1582 = vld [vmem:[%s1575 + $0x30] sm:$0xff]
    %v1583 = vld [vmem:[%s1575 + $0x38] sm:$0xff]
    %v1584 = vld [vmem:[%s1575 + $0x40] sm:$0xff]
    %v1585 = vld [vmem:[%s1575 + $0x48] sm:$0xff]
    %v1586 = vld [vmem:[%s1575 + $0x50] sm:$0xff]
    %v1587 = vld [vmem:[%s1575 + $0x58] sm:$0xff]
    %v1588 = vld [vmem:[%s1575 + $0x60] sm:$0xff]
    %v1589 = vld [vmem:[%s1575 + $0x68] sm:$0xff]
    %v1590 = vld [vmem:[%s1575 + $0x70] sm:$0xff]
    %v1591 = vld [vmem:[%s1575 + $0x78] sm:$0xff]
    %v1592 = vld [vmem:[%s1575 + $0x80] sm:$0xff]
    %v1593 = vld [vmem:[%s1575 + $0x88] sm:$0xff]
    %v1594 = vld [vmem:[%s1575 + $0x90] sm:$0xff]
    %v1595 = vld [vmem:[%s1575 + $0x98] sm:$0xff]
    %v1596 = vld [vmem:[%s1575 + $0xa0] sm:$0xff]
    %v1597 = vld [vmem:[%s1575 + $0xa8] sm:$0xff]
    %v1598 = vld [vmem:[%s1575 + $0xb0] sm:$0xff]
    %v1599 = vld [vmem:[%s1575 + $0xb8] sm:$0xff]
    %v1600 = vld [vmem:[%s1575 + $0xc0] sm:$0xff]
    %v1601 = vld [vmem:[%s1575 + $0xc8] sm:$0xff]
    %v1602 = vld [vmem:[%s1575 + $0xd0] sm:$0xff]
    %v1603 = vld [vmem:[%s1575 + $0xd8] sm:$0xff]
    %v1604 = vld [vmem:[%s1575 + $0xe0] sm:$0xff]
    %v1605 = vld [vmem:[%s1575 + $0xe8] sm:$0xff]
    %v1606 = vld [vmem:[%s1575 + $0xf0] sm:$0xff]
    %v1607 = vld [vmem:[%s1575 + $0xf8] sm:$0xff]
    %v1608 = vld [vmem:[%s1575 + $0x100] sm:$0xff]
    %v1609 = vld [vmem:[%s1575 + $0x108] sm:$0xff]
    %v1610 = vld [vmem:[%s1575 + $0x110] sm:$0xff]
    %v1611 = vld [vmem:[%s1575 + $0x118] sm:$0xff]
    %v1612 = vld [vmem:[%s1575 + $0x120] sm:$0xff]
    %v1613 = vld [vmem:[%s1575 + $0x128] sm:$0xff]
    %v1614 = vld [vmem:[%s1575 + $0x130] sm:$0xff]
    %v1615 = vld [vmem:[%s1575 + $0x138] sm:$0xff]
    %v1616 = vld [vmem:[%s1575 + $0x140] sm:$0xff]
    %v1617 = vld [vmem:[%s1575 + $0x148] sm:$0xff]
    %v1619 = vsel %vm1107, %v1572, 0
    %v1622 = vsel %vm1107, %v1570, 0
    %v1625 = vsel %vm1107, %v1568, 0
    %v1628 = vsel %vm1107, %v1574, 0
    %1630 = vmatpush.msra.mxu0 %v1606
    %1631 = vmatpush.msra.mxu0 %v1604
    %1632 = vmatpush.msra.mxu0 %v1602
    %1633 = vmatpush.msra.mxu0 %v1600
    %1634 = vmatpush.msra.mxu0 %v1598
    %1635 = vmatpush.msra.mxu0 %v1596
    %1636 = vmatpush.msra.mxu0 %v1594
    %1637 = vmatpush.msra.mxu0 %v1592
    %1638 = vmatpush.msra.mxu0 %v1590
    %1639 = vmatpush.msra.mxu0 %v1588
    %1640 = vmatpush.msra.mxu0 %v1586
    %1641 = vmatpush.msra.mxu0 %v1584
    %1642 = vmatpush.msra.mxu0 %v1582
    %1643 = vmatpush.msra.mxu0 %v1580
    %1644 = vmatpush.msra.mxu0 %v1578
    %1645 = vmatpush.msra.mxu0 %v1576
    %1646 = vmatmul.f32.gmra.mxu0 %v1571
    %v1647 = vpop.f32.mrf.mxu0
    %v1648 = vadd.f32 0.0, %v1647
    %1649 = vmatmul.f32.gmra.mxu0 %v1569
    %v1650 = vpop.f32.mrf.mxu0
    %v1651 = vadd.f32 0.0, %v1650
    %1652 = vmatmul.f32.gmra.mxu0 %v1567
    %v1653 = vpop.f32.mrf.mxu0
    %v1654 = vadd.f32 0.0, %v1653
    %1655 = vmatmul.f32.gmra.mxu0 %v1573
    %v1656 = vpop.f32.mrf.mxu0
    %v1657 = vadd.f32 0.0, %v1656
    %1658 = vdwg.mxu0
    %1659 = vmatpush.msra.mxu0 0.0
    %1660 = vmatpush.msra.mxu0 0.0
    %1661 = vmatpush.msra.mxu0 0.0
    %1662 = vmatpush.msra.mxu0 0.0
    %1663 = vmatpush.msra.mxu0 0.0
    %1664 = vmatpush.msra.mxu0 0.0
    %1665 = vmatpush.msra.mxu0 0.0
    %1666 = vmatpush.msra.mxu0 0.0
    %1667 = vmatpush.msra.mxu0 0.0
    %1668 = vmatpush.msra.mxu0 0.0
    %1669 = vmatpush.msra.mxu0 0.0
    %1670 = vmatpush.msra.mxu0 %v1616
    %1671 = vmatpush.msra.mxu0 %v1614
    %1672 = vmatpush.msra.mxu0 %v1612
    %1673 = vmatpush.msra.mxu0 %v1610
    %1674 = vmatpush.msra.mxu0 %v1608
    %1675 = vmatmul.f32.gmra.mxu0 %v1619
    %v1676 = vpop.f32.mrf.mxu0
    %v1677 = vadd.f32 %v1648, %v1676
    %1678 = vmatmul.f32.gmra.mxu0 %v1622
    %v1679 = vpop.f32.mrf.mxu0
    %v1680 = vadd.f32 %v1651, %v1679
    %1681 = vmatmul.f32.gmra.mxu0 %v1625
    %v1682 = vpop.f32.mrf.mxu0
    %v1683 = vadd.f32 %v1654, %v1682
    %1684 = vmatmul.f32.gmra.mxu0 %v1628
    %v1685 = vpop.f32.mrf.mxu0
    %v1686 = vadd.f32 %v1657, %v1685
    %1687 = vdwg.mxu0
    %1688 = vmatpush.msra.mxu0 %v1607
    %1689 = vmatpush.msra.mxu0 %v1605
    %1690 = vmatpush.msra.mxu0 %v1603
    %1691 = vmatpush.msra.mxu0 %v1601
    %1692 = vmatpush.msra.mxu0 %v1599
    %1693 = vmatpush.msra.mxu0 %v1597
    %1694 = vmatpush.msra.mxu0 %v1595
    %1695 = vmatpush.msra.mxu0 %v1593
    %1696 = vmatpush.msra.mxu0 %v1591
    %1697 = vmatpush.msra.mxu0 %v1589
    %1698 = vmatpush.msra.mxu0 %v1587
    %1699 = vmatpush.msra.mxu0 %v1585
    %1700 = vmatpush.msra.mxu0 %v1583
    %1701 = vmatpush.msra.mxu0 %v1581
    %1702 = vmatpush.msra.mxu0 %v1579
    %1703 = vmatpush.msra.mxu0 %v1577
    %1704 = vmatmul.f32.gmra.mxu0 %v1571
    %v1705 = vpop.f32.mrf.mxu0
    %v1706 = vadd.f32 0.0, %v1705
    %1707 = vmatmul.f32.gmra.mxu0 %v1569
    %v1708 = vpop.f32.mrf.mxu0
    %v1709 = vadd.f32 0.0, %v1708
    %1710 = vmatmul.f32.gmra.mxu0 %v1567
    %v1711 = vpop.f32.mrf.mxu0
    %v1712 = vadd.f32 0.0, %v1711
    %1713 = vmatmul.f32.gmra.mxu0 %v1573
    %v1714 = vpop.f32.mrf.mxu0
    %v1715 = vadd.f32 0.0, %v1714
    %1716 = vdwg.mxu0
    %1717 = vmatpush.msra.mxu0 0.0
    %1718 = vmatpush.msra.mxu0 0.0
    %1719 = vmatpush.msra.mxu0 0.0
    %1720 = vmatpush.msra.mxu0 0.0
    %1721 = vmatpush.msra.mxu0 0.0
    %1722 = vmatpush.msra.mxu0 0.0
    %1723 = vmatpush.msra.mxu0 0.0
    %1724 = vmatpush.msra.mxu0 0.0
    %1725 = vmatpush.msra.mxu0 0.0
    %1726 = vmatpush.msra.mxu0 0.0
    %1727 = vmatpush.msra.mxu0 0.0
    %1728 = vmatpush.msra.mxu0 %v1617
    %1729 = vmatpush.msra.mxu0 %v1615
    %1730 = vmatpush.msra.mxu0 %v1613
    %1731 = vmatpush.msra.mxu0 %v1611
    %1732 = vmatpush.msra.mxu0 %v1609
    %1733 = vmatmul.f32.gmra.mxu0 %v1619
    %v1734 = vpop.f32.mrf.mxu0
    %v1735 = vadd.f32 %v1706, %v1734
    %1736 = vmatmul.f32.gmra.mxu0 %v1622
    %v1737 = vpop.f32.mrf.mxu0
    %v1738 = vadd.f32 %v1709, %v1737
    %1739 = vmatmul.f32.gmra.mxu0 %v1625
    %v1740 = vpop.f32.mrf.mxu0
    %v1741 = vadd.f32 %v1712, %v1740
    %1742 = vmatmul.f32.gmra.mxu0 %v1628
    %v1743 = vpop.f32.mrf.mxu0
    %v1744 = vadd.f32 %v1715, %v1743
    %1745 = vdwg.mxu0
    %v1746 = vadd.f32 %v1551, %v1677
    %v1747 = vadd.f32 %v1552, %v1735
    %v1748 = vadd.f32 %v1553, %v1680
    %v1749 = vadd.f32 %v1554, %v1738
    %v1750 = vadd.f32 %v1555, %v1683
    %v1751 = vadd.f32 %v1556, %v1741
    %v1752 = vadd.f32 %v1557, %v1686
    %v1753 = vadd.f32 %v1558, %v1744
    %v1754 = vrot.slane %v966, 4
    %v1755 = vrot.slane %v995, 4
    %v1756 = vrot.slane %v969, 4
    %v1757 = vrot.slane %v998, 4
    %v1758 = vrot.slane %v972, 4
    %v1759 = vrot.slane %v1001, 4
    %v1760 = vrot.slane %v975, 4
    %v1761 = vrot.slane %v1004, 4
    %v1762 = vsel %vm591, %v1758, %v1760
    %v1763 = vsel %vm591, %v1759, %v1761
    %v1764 = vsel %vm591, %v1756, %v1758
    %v1765 = vsel %vm591, %v1757, %v1759
    %v1766 = vsel %vm591, %v1754, %v1756
    %v1767 = vsel %vm591, %v1755, %v1757
    %v1768 = vsel %vm591, %v1760, %v1754
    %v1769 = vsel %vm591, %v1761, %v1755
    %s1770 = scalar_lea.vmem %s2, 1344
    %v1771 = vld [vmem:[%s1770] sm:$0xff]
    %v1772 = vld [vmem:[%s1770 + $0x8] sm:$0xff]
    %v1773 = vld [vmem:[%s1770 + $0x10] sm:$0xff]
    %v1774 = vld [vmem:[%s1770 + $0x18] sm:$0xff]
    %v1775 = vld [vmem:[%s1770 + $0x20] sm:$0xff]
    %v1776 = vld [vmem:[%s1770 + $0x28] sm:$0xff]
    %v1777 = vld [vmem:[%s1770 + $0x30] sm:$0xff]
    %v1778 = vld [vmem:[%s1770 + $0x38] sm:$0xff]
    %v1779 = vld [vmem:[%s1770 + $0x40] sm:$0xff]
    %v1780 = vld [vmem:[%s1770 + $0x48] sm:$0xff]
    %v1781 = vld [vmem:[%s1770 + $0x50] sm:$0xff]
    %v1782 = vld [vmem:[%s1770 + $0x58] sm:$0xff]
    %v1783 = vld [vmem:[%s1770 + $0x60] sm:$0xff]
    %v1784 = vld [vmem:[%s1770 + $0x68] sm:$0xff]
    %v1785 = vld [vmem:[%s1770 + $0x70] sm:$0xff]
    %v1786 = vld [vmem:[%s1770 + $0x78] sm:$0xff]
    %v1787 = vld [vmem:[%s1770 + $0x80] sm:$0xff]
    %v1788 = vld [vmem:[%s1770 + $0x88] sm:$0xff]
    %v1789 = vld [vmem:[%s1770 + $0x90] sm:$0xff]
    %v1790 = vld [vmem:[%s1770 + $0x98] sm:$0xff]
    %v1791 = vld [vmem:[%s1770 + $0xa0] sm:$0xff]
    %v1792 = vld [vmem:[%s1770 + $0xa8] sm:$0xff]
    %v1793 = vld [vmem:[%s1770 + $0xb0] sm:$0xff]
    %v1794 = vld [vmem:[%s1770 + $0xb8] sm:$0xff]
    %v1795 = vld [vmem:[%s1770 + $0xc0] sm:$0xff]
    %v1796 = vld [vmem:[%s1770 + $0xc8] sm:$0xff]
    %v1797 = vld [vmem:[%s1770 + $0xd0] sm:$0xff]
    %v1798 = vld [vmem:[%s1770 + $0xd8] sm:$0xff]
    %v1799 = vld [vmem:[%s1770 + $0xe0] sm:$0xff]
    %v1800 = vld [vmem:[%s1770 + $0xe8] sm:$0xff]
    %v1801 = vld [vmem:[%s1770 + $0xf0] sm:$0xff]
    %v1802 = vld [vmem:[%s1770 + $0xf8] sm:$0xff]
    %v1803 = vld [vmem:[%s1770 + $0x100] sm:$0xff]
    %v1804 = vld [vmem:[%s1770 + $0x108] sm:$0xff]
    %v1805 = vld [vmem:[%s1770 + $0x110] sm:$0xff]
    %v1806 = vld [vmem:[%s1770 + $0x118] sm:$0xff]
    %v1807 = vld [vmem:[%s1770 + $0x120] sm:$0xff]
    %v1808 = vld [vmem:[%s1770 + $0x128] sm:$0xff]
    %v1809 = vld [vmem:[%s1770 + $0x130] sm:$0xff]
    %v1810 = vld [vmem:[%s1770 + $0x138] sm:$0xff]
    %v1811 = vld [vmem:[%s1770 + $0x140] sm:$0xff]
    %v1812 = vld [vmem:[%s1770 + $0x148] sm:$0xff]
    %v1814 = vsel %vm1107, %v1767, 0
    %v1817 = vsel %vm1107, %v1765, 0
    %v1820 = vsel %vm1107, %v1763, 0
    %v1823 = vsel %vm1107, %v1769, 0
    %1825 = vmatpush.msra.mxu0 %v1801
    %1826 = vmatpush.msra.mxu0 %v1799
    %1827 = vmatpush.msra.mxu0 %v1797
    %1828 = vmatpush.msra.mxu0 %v1795
    %1829 = vmatpush.msra.mxu0 %v1793
    %1830 = vmatpush.msra.mxu0 %v1791
    %1831 = vmatpush.msra.mxu0 %v1789
    %1832 = vmatpush.msra.mxu0 %v1787
    %1833 = vmatpush.msra.mxu0 %v1785
    %1834 = vmatpush.msra.mxu0 %v1783
    %1835 = vmatpush.msra.mxu0 %v1781
    %1836 = vmatpush.msra.mxu0 %v1779
    %1837 = vmatpush.msra.mxu0 %v1777
    %1838 = vmatpush.msra.mxu0 %v1775
    %1839 = vmatpush.msra.mxu0 %v1773
    %1840 = vmatpush.msra.mxu0 %v1771
    %1841 = vmatmul.f32.gmra.mxu0 %v1766
    %v1842 = vpop.f32.mrf.mxu0
    %v1843 = vadd.f32 0.0, %v1842
    %1844 = vmatmul.f32.gmra.mxu0 %v1764
    %v1845 = vpop.f32.mrf.mxu0
    %v1846 = vadd.f32 0.0, %v1845
    %1847 = vmatmul.f32.gmra.mxu0 %v1762
    %v1848 = vpop.f32.mrf.mxu0
    %v1849 = vadd.f32 0.0, %v1848
    %1850 = vmatmul.f32.gmra.mxu0 %v1768
    %v1851 = vpop.f32.mrf.mxu0
    %v1852 = vadd.f32 0.0, %v1851
    %1853 = vdwg.mxu0
    %1854 = vmatpush.msra.mxu0 0.0
    %1855 = vmatpush.msra.mxu0 0.0
    %1856 = vmatpush.msra.mxu0 0.0
    %1857 = vmatpush.msra.mxu0 0.0
    %1858 = vmatpush.msra.mxu0 0.0
    %1859 = vmatpush.msra.mxu0 0.0
    %1860 = vmatpush.msra.mxu0 0.0
    %1861 = vmatpush.msra.mxu0 0.0
    %1862 = vmatpush.msra.mxu0 0.0
    %1863 = vmatpush.msra.mxu0 0.0
    %1864 = vmatpush.msra.mxu0 0.0
    %1865 = vmatpush.msra.mxu0 %v1811
    %1866 = vmatpush.msra.mxu0 %v1809
    %1867 = vmatpush.msra.mxu0 %v1807
    %1868 = vmatpush.msra.mxu0 %v1805
    %1869 = vmatpush.msra.mxu0 %v1803
    %1870 = vmatmul.f32.gmra.mxu0 %v1814
    %v1871 = vpop.f32.mrf.mxu0
    %v1872 = vadd.f32 %v1843, %v1871
    %1873 = vmatmul.f32.gmra.mxu0 %v1817
    %v1874 = vpop.f32.mrf.mxu0
    %v1875 = vadd.f32 %v1846, %v1874
    %1876 = vmatmul.f32.gmra.mxu0 %v1820
    %v1877 = vpop.f32.mrf.mxu0
    %v1878 = vadd.f32 %v1849, %v1877
    %1879 = vmatmul.f32.gmra.mxu0 %v1823
    %v1880 = vpop.f32.mrf.mxu0
    %v1881 = vadd.f32 %v1852, %v1880
    %1882 = vdwg.mxu0
    %1883 = vmatpush.msra.mxu0 %v1802
    %1884 = vmatpush.msra.mxu0 %v1800
    %1885 = vmatpush.msra.mxu0 %v1798
    %1886 = vmatpush.msra.mxu0 %v1796
    %1887 = vmatpush.msra.mxu0 %v1794
    %1888 = vmatpush.msra.mxu0 %v1792
    %1889 = vmatpush.msra.mxu0 %v1790
    %1890 = vmatpush.msra.mxu0 %v1788
    %1891 = vmatpush.msra.mxu0 %v1786
    %1892 = vmatpush.msra.mxu0 %v1784
    %1893 = vmatpush.msra.mxu0 %v1782
    %1894 = vmatpush.msra.mxu0 %v1780
    %1895 = vmatpush.msra.mxu0 %v1778
    %1896 = vmatpush.msra.mxu0 %v1776
    %1897 = vmatpush.msra.mxu0 %v1774
    %1898 = vmatpush.msra.mxu0 %v1772
    %1899 = vmatmul.f32.gmra.mxu0 %v1766
    %v1900 = vpop.f32.mrf.mxu0
    %v1901 = vadd.f32 0.0, %v1900
    %1902 = vmatmul.f32.gmra.mxu0 %v1764
    %v1903 = vpop.f32.mrf.mxu0
    %v1904 = vadd.f32 0.0, %v1903
    %1905 = vmatmul.f32.gmra.mxu0 %v1762
    %v1906 = vpop.f32.mrf.mxu0
    %v1907 = vadd.f32 0.0, %v1906
    %1908 = vmatmul.f32.gmra.mxu0 %v1768
    %v1909 = vpop.f32.mrf.mxu0
    %v1910 = vadd.f32 0.0, %v1909
    %1911 = vdwg.mxu0
    %1912 = vmatpush.msra.mxu0 0.0
    %1913 = vmatpush.msra.mxu0 0.0
    %1914 = vmatpush.msra.mxu0 0.0
    %1915 = vmatpush.msra.mxu0 0.0
    %1916 = vmatpush.msra.mxu0 0.0
    %1917 = vmatpush.msra.mxu0 0.0
    %1918 = vmatpush.msra.mxu0 0.0
    %1919 = vmatpush.msra.mxu0 0.0
    %1920 = vmatpush.msra.mxu0 0.0
    %1921 = vmatpush.msra.mxu0 0.0
    %1922 = vmatpush.msra.mxu0 0.0
    %1923 = vmatpush.msra.mxu0 %v1812
    %1924 = vmatpush.msra.mxu0 %v1810
    %1925 = vmatpush.msra.mxu0 %v1808
    %1926 = vmatpush.msra.mxu0 %v1806
    %1927 = vmatpush.msra.mxu0 %v1804
    %1928 = vmatmul.f32.gmra.mxu0 %v1814
    %v1929 = vpop.f32.mrf.mxu0
    %v1930 = vadd.f32 %v1901, %v1929
    %1931 = vmatmul.f32.gmra.mxu0 %v1817
    %v1932 = vpop.f32.mrf.mxu0
    %v1933 = vadd.f32 %v1904, %v1932
    %1934 = vmatmul.f32.gmra.mxu0 %v1820
    %v1935 = vpop.f32.mrf.mxu0
    %v1936 = vadd.f32 %v1907, %v1935
    %1937 = vmatmul.f32.gmra.mxu0 %v1823
    %v1938 = vpop.f32.mrf.mxu0
    %v1939 = vadd.f32 %v1910, %v1938
    %1940 = vdwg.mxu0
    %v1941 = vadd.f32 %v1746, %v1872
    %v1942 = vadd.f32 %v1747, %v1930
    %v1943 = vadd.f32 %v1748, %v1875
    %v1944 = vadd.f32 %v1749, %v1933
    %v1945 = vadd.f32 %v1750, %v1878
    %v1946 = vadd.f32 %v1751, %v1936
    %v1947 = vadd.f32 %v1752, %v1881
    %v1948 = vadd.f32 %v1753, %v1939
    %s1949 = scalar_lea.vmem %s6, 1
    %v1950 = vld [vmem:[%s1949] ss:$8 sm:$0x3]
    %v1952 = vperm.slane %v1950, 0
    %v1953 = vperm.slane %v1950, 1
    %v1956 = vadd.f32 %v1941, %v1952
    %v1957 = vadd.f32 %v1942, %v1953
    %v1958 = vadd.f32 %v1943, %v1952
    %v1959 = vadd.f32 %v1944, %v1953
    %v1960 = vadd.f32 %v1945, %v1952
    %v1961 = vadd.f32 %v1946, %v1953
    %v1962 = vadd.f32 %v1947, %v1952
    %v1963 = vadd.f32 %v1948, %v1953
    %v1964 = vmax.f32 %v1956, 0.0
    %v1965 = vmax.f32 %v1957, 0.0
    %v1966 = vmax.f32 %v1958, 0.0
    %v1967 = vmax.f32 %v1959, 0.0
    %v1968 = vmax.f32 %v1960, 0.0
    %v1969 = vmax.f32 %v1961, 0.0
    %v1970 = vmax.f32 %v1962, 0.0
    %v1971 = vmax.f32 %v1963, 0.0
    %vm1972 = vcmask 1047808
    %1973 = vrot.lane.b32.xlu0 %v1964, 32
    %v1974 = vpop.permute.xlu0 %1973
    %1975 = vrot.lane.b32.xlu0 %v1966, 32
    %v1976 = vpop.permute.xlu0 %1975
    %1977 = vrot.lane.b32.xlu0 %v1968, 32
    %v1978 = vpop.permute.xlu0 %1977
    %1979 = vrot.lane.b32.xlu0 %v1970, 32
    %v1980 = vpop.permute.xlu0 %1979
    %v1981 = vsel %vm1972, %v1974, %v1965
    %v1982 = vsel %vm1972, %v1976, %v1967
    %v1983 = vsel %vm1972, %v1978, %v1969
    %v1984 = vsel %vm1972, %v1980, %v1971
    %1993 = vrot.lane.b32.xlu0 %v1964, 127
    %v1994 = vpop.permute.xlu0 %1993
    %1995 = vrot.lane.b32.xlu0 %v1981, 127
    %v1996 = vpop.permute.xlu0 %1995
    %1997 = vrot.lane.b32.xlu0 %v1966, 127
    %v1998 = vpop.permute.xlu0 %1997
    %1999 = vrot.lane.b32.xlu0 %v1982, 127
    %v2000 = vpop.permute.xlu0 %1999
    %2001 = vrot.lane.b32.xlu0 %v1968, 127
    %v2002 = vpop.permute.xlu0 %2001
    %2003 = vrot.lane.b32.xlu0 %v1983, 127
    %v2004 = vpop.permute.xlu0 %2003
    %2005 = vrot.lane.b32.xlu0 %v1970, 127
    %v2006 = vpop.permute.xlu0 %2005
    %2007 = vrot.lane.b32.xlu0 %v1984, 127
    %v2008 = vpop.permute.xlu0 %2007
    %v2009 = vsel %vm842, %v1994, %v1996
    %v2010 = vsel %vm842, %v1998, %v2000
    %v2011 = vsel %vm842, %v2002, %v2004
    %v2012 = vsel %vm842, %v2006, %v2008
    %v2021 = vmax.f32 %v1964, %v2009
    %v2022 = vmax.f32 %v1965, %v1996
    %v2023 = vmax.f32 %v1966, %v2010
    %v2024 = vmax.f32 %v1967, %v2000
    %v2025 = vmax.f32 %v1968, %v2011
    %v2026 = vmax.f32 %v1969, %v2004
    %v2027 = vmax.f32 %v1970, %v2012
    %v2028 = vmax.f32 %v1971, %v2008
    %v2029 = vrot.slane %v2021, 1
    %v2030 = vrot.slane %v2022, 1
    %v2031 = vrot.slane %v2023, 1
    %v2032 = vrot.slane %v2024, 1
    %v2033 = vrot.slane %v2025, 1
    %v2034 = vrot.slane %v2026, 1
    %v2035 = vrot.slane %v2027, 1
    %v2036 = vrot.slane %v2028, 1
    %v2037 = vsel %vm56, %v2033, %v2035
    %v2038 = vsel %vm56, %v2034, %v2036
    %v2039 = vsel %vm56, %v2031, %v2033
    %v2040 = vsel %vm56, %v2032, %v2034
    %v2041 = vsel %vm56, %v2029, %v2031
    %v2042 = vsel %vm56, %v2030, %v2032
    %v2043 = vsel %vm56, %v2035, %v2029
    %v2044 = vsel %vm56, %v2036, %v2030
    %v2045 = vmax.f32 %v2021, %v2041
    %v2046 = vmax.f32 %v2022, %v2042
    %v2047 = vmax.f32 %v2023, %v2039
    %v2048 = vmax.f32 %v2024, %v2040
    %v2049 = vmax.f32 %v2025, %v2037
    %v2050 = vmax.f32 %v2026, %v2038
    %v2051 = vmax.f32 %v2027, %v2043
    %v2052 = vmax.f32 %v2028, %v2044
    %v2053 = vld [vmem:[%s3] sm:$0xff]
    %v2054 = vld [vmem:[%s3 + $0x8] sm:$0xff]
    %v2055 = vld [vmem:[%s3 + $0x10] sm:$0xff]
    %v2056 = vld [vmem:[%s3 + $0x18] sm:$0xff]
    %v2057 = vld [vmem:[%s3 + $0x20] sm:$0xff]
    %v2058 = vld [vmem:[%s3 + $0x28] sm:$0xff]
    %v2059 = vld [vmem:[%s3 + $0x30] sm:$0xff]
    %v2060 = vld [vmem:[%s3 + $0x38] sm:$0xff]
    %v2061 = vld [vmem:[%s3 + $0x40] sm:$0xff]
    %v2062 = vld [vmem:[%s3 + $0x48] sm:$0xff]
    %v2063 = vld [vmem:[%s3 + $0x50] sm:$0xff]
    %v2064 = vld [vmem:[%s3 + $0x58] sm:$0xff]
    %v2065 = vld [vmem:[%s3 + $0x60] sm:$0xff]
    %v2066 = vld [vmem:[%s3 + $0x68] sm:$0xff]
    %v2067 = vld [vmem:[%s3 + $0x70] sm:$0xff]
    %v2068 = vld [vmem:[%s3 + $0x78] sm:$0xff]
    %v2069 = vld [vmem:[%s3 + $0x80] sm:$0xff]
    %v2070 = vld [vmem:[%s3 + $0x88] sm:$0xff]
    %v2071 = vld [vmem:[%s3 + $0x90] sm:$0xff]
    %v2072 = vld [vmem:[%s3 + $0x98] sm:$0xff]
    %v2073 = vrot.slane %v2045, 2
    %v2074 = vrot.slane %v2046, 2
    %v2075 = vrot.slane %v2047, 2
    %v2076 = vrot.slane %v2048, 2
    %v2077 = vrot.slane %v2049, 2
    %v2078 = vrot.slane %v2050, 2
    %v2079 = vrot.slane %v2051, 2
    %v2080 = vrot.slane %v2052, 2
    %v2081 = vsel %vm295, %v2077, %v2079
    %v2082 = vsel %vm295, %v2078, %v2080
    %v2083 = vsel %vm295, %v2075, %v2077
    %v2084 = vsel %vm295, %v2076, %v2078
    %v2085 = vsel %vm295, %v2073, %v2075
    %v2086 = vsel %vm295, %v2074, %v2076
    %v2087 = vsel %vm295, %v2079, %v2073
    %v2088 = vsel %vm295, %v2080, %v2074
    %s2089 = scalar_lea.vmem %s3, 160
    %v2090 = vld [vmem:[%s2089] sm:$0xff]
    %v2091 = vld [vmem:[%s2089 + $0x8] sm:$0xff]
    %v2092 = vld [vmem:[%s2089 + $0x10] sm:$0xff]
    %v2093 = vld [vmem:[%s2089 + $0x18] sm:$0xff]
    %v2094 = vld [vmem:[%s2089 + $0x20] sm:$0xff]
    %v2095 = vld [vmem:[%s2089 + $0x28] sm:$0xff]
    %v2096 = vld [vmem:[%s2089 + $0x30] sm:$0xff]
    %v2097 = vld [vmem:[%s2089 + $0x38] sm:$0xff]
    %v2098 = vld [vmem:[%s2089 + $0x40] sm:$0xff]
    %v2099 = vld [vmem:[%s2089 + $0x48] sm:$0xff]
    %v2100 = vld [vmem:[%s2089 + $0x50] sm:$0xff]
    %v2101 = vld [vmem:[%s2089 + $0x58] sm:$0xff]
    %v2102 = vld [vmem:[%s2089 + $0x60] sm:$0xff]
    %v2103 = vld [vmem:[%s2089 + $0x68] sm:$0xff]
    %v2104 = vld [vmem:[%s2089 + $0x70] sm:$0xff]
    %v2105 = vld [vmem:[%s2089 + $0x78] sm:$0xff]
    %v2106 = vld [vmem:[%s2089 + $0x80] sm:$0xff]
    %v2107 = vld [vmem:[%s2089 + $0x88] sm:$0xff]
    %v2108 = vld [vmem:[%s2089 + $0x90] sm:$0xff]
    %v2109 = vld [vmem:[%s2089 + $0x98] sm:$0xff]
    %v2111 = vsel %vm74, %v2086, 0
    %v2114 = vsel %vm74, %v2084, 0
    %v2117 = vsel %vm74, %v2082, 0
    %v2120 = vsel %vm74, %v2088, 0
    %2122 = vmatpush.msra.mxu0 %v2105
    %2123 = vmatpush.msra.mxu0 %v2104
    %2124 = vmatpush.msra.mxu0 %v2103
    %2125 = vmatpush.msra.mxu0 %v2102
    %2126 = vmatpush.msra.mxu0 %v2101
    %2127 = vmatpush.msra.mxu0 %v2100
    %2128 = vmatpush.msra.mxu0 %v2099
    %2129 = vmatpush.msra.mxu0 %v2098
    %2130 = vmatpush.msra.mxu0 %v2097
    %2131 = vmatpush.msra.mxu0 %v2096
    %2132 = vmatpush.msra.mxu0 %v2095
    %2133 = vmatpush.msra.mxu0 %v2094
    %2134 = vmatpush.msra.mxu0 %v2093
    %2135 = vmatpush.msra.mxu0 %v2092
    %2136 = vmatpush.msra.mxu0 %v2091
    %2137 = vmatpush.msra.mxu0 %v2090
    %2138 = vmatmul.f32.gmra.mxu0 %v2085
    %v2139 = vpop.f32.mrf.mxu0
    %v2140 = vadd.f32 0.0, %v2139
    %2141 = vmatmul.f32.gmra.mxu0 %v2083
    %v2142 = vpop.f32.mrf.mxu0
    %v2143 = vadd.f32 0.0, %v2142
    %2144 = vmatmul.f32.gmra.mxu0 %v2081
    %v2145 = vpop.f32.mrf.mxu0
    %v2146 = vadd.f32 0.0, %v2145
    %2147 = vmatmul.f32.gmra.mxu0 %v2087
    %v2148 = vpop.f32.mrf.mxu0
    %v2149 = vadd.f32 0.0, %v2148
    %2150 = vdwg.mxu0
    %2151 = vmatpush.msra.mxu0 0.0
    %2152 = vmatpush.msra.mxu0 0.0
    %2153 = vmatpush.msra.mxu0 0.0
    %2154 = vmatpush.msra.mxu0 0.0
    %2155 = vmatpush.msra.mxu0 0.0
    %2156 = vmatpush.msra.mxu0 0.0
    %2157 = vmatpush.msra.mxu0 0.0
    %2158 = vmatpush.msra.mxu0 0.0
    %2159 = vmatpush.msra.mxu0 0.0
    %2160 = vmatpush.msra.mxu0 0.0
    %2161 = vmatpush.msra.mxu0 0.0
    %2162 = vmatpush.msra.mxu0 0.0
    %2163 = vmatpush.msra.mxu0 %v2109
    %2164 = vmatpush.msra.mxu0 %v2108
    %2165 = vmatpush.msra.mxu0 %v2107
    %2166 = vmatpush.msra.mxu0 %v2106
    %2167 = vmatmul.f32.gmra.mxu0 %v2111
    %v2168 = vpop.f32.mrf.mxu0
    %v2169 = vadd.f32 %v2140, %v2168
    %2170 = vmatmul.f32.gmra.mxu0 %v2114
    %v2171 = vpop.f32.mrf.mxu0
    %v2172 = vadd.f32 %v2143, %v2171
    %2173 = vmatmul.f32.gmra.mxu0 %v2117
    %v2174 = vpop.f32.mrf.mxu0
    %v2175 = vadd.f32 %v2146, %v2174
    %2176 = vmatmul.f32.gmra.mxu0 %v2120
    %v2177 = vpop.f32.mrf.mxu0
    %v2178 = vadd.f32 %v2149, %v2177
    %2179 = vdwg.mxu0
    %v2181 = vsel %vm74, %v2046, 0
    %v2184 = vsel %vm74, %v2048, 0
    %v2187 = vsel %vm74, %v2050, 0
    %v2190 = vsel %vm74, %v2052, 0
    %2192 = vmatpush.msra.mxu0 %v2068
    %2193 = vmatpush.msra.mxu0 %v2067
    %2194 = vmatpush.msra.mxu0 %v2066
    %2195 = vmatpush.msra.mxu0 %v2065
    %2196 = vmatpush.msra.mxu0 %v2064
    %2197 = vmatpush.msra.mxu0 %v2063
    %2198 = vmatpush.msra.mxu0 %v2062
    %2199 = vmatpush.msra.mxu0 %v2061
    %2200 = vmatpush.msra.mxu0 %v2060
    %2201 = vmatpush.msra.mxu0 %v2059
    %2202 = vmatpush.msra.mxu0 %v2058
    %2203 = vmatpush.msra.mxu0 %v2057
    %2204 = vmatpush.msra.mxu0 %v2056
    %2205 = vmatpush.msra.mxu0 %v2055
    %2206 = vmatpush.msra.mxu0 %v2054
    %2207 = vmatpush.msra.mxu0 %v2053
    %2208 = vmatmul.f32.gmra.mxu0 %v2045
    %v2209 = vpop.f32.mrf.mxu0
    %v2210 = vadd.f32 %v2169, %v2209
    %2211 = vmatmul.f32.gmra.mxu0 %v2047
    %v2212 = vpop.f32.mrf.mxu0
    %v2213 = vadd.f32 %v2172, %v2212
    %2214 = vmatmul.f32.gmra.mxu0 %v2049
    %v2215 = vpop.f32.mrf.mxu0
    %v2216 = vadd.f32 %v2175, %v2215
    %2217 = vmatmul.f32.gmra.mxu0 %v2051
    %v2218 = vpop.f32.mrf.mxu0
    %v2219 = vadd.f32 %v2178, %v2218
    %2220 = vdwg.mxu0
    %2221 = vmatpush.msra.mxu0 0.0
    %2222 = vmatpush.msra.mxu0 0.0
    %2223 = vmatpush.msra.mxu0 0.0
    %2224 = vmatpush.msra.mxu0 0.0
    %2225 = vmatpush.msra.mxu0 0.0
    %2226 = vmatpush.msra.mxu0 0.0
    %2227 = vmatpush.msra.mxu0 0.0
    %2228 = vmatpush.msra.mxu0 0.0
    %2229 = vmatpush.msra.mxu0 0.0
    %2230 = vmatpush.msra.mxu0 0.0
    %2231 = vmatpush.msra.mxu0 0.0
    %2232 = vmatpush.msra.mxu0 0.0
    %2233 = vmatpush.msra.mxu0 %v2072
    %2234 = vmatpush.msra.mxu0 %v2071
    %2235 = vmatpush.msra.mxu0 %v2070
    %2236 = vmatpush.msra.mxu0 %v2069
    %2237 = vmatmul.f32.gmra.mxu0 %v2181
    %v2238 = vpop.f32.mrf.mxu0
    %v2239 = vadd.f32 %v2210, %v2238
    %2240 = vmatmul.f32.gmra.mxu0 %v2184
    %v2241 = vpop.f32.mrf.mxu0
    %v2242 = vadd.f32 %v2213, %v2241
    %2243 = vmatmul.f32.gmra.mxu0 %v2187
    %v2244 = vpop.f32.mrf.mxu0
    %v2245 = vadd.f32 %v2216, %v2244
    %2246 = vmatmul.f32.gmra.mxu0 %v2190
    %v2247 = vpop.f32.mrf.mxu0
    %v2248 = vadd.f32 %v2219, %v2247
    %2249 = vdwg.mxu0
    %v2250 = vrot.slane %v2045, 4
    %v2251 = vrot.slane %v2046, 4
    %v2252 = vrot.slane %v2047, 4
    %v2253 = vrot.slane %v2048, 4
    %v2254 = vrot.slane %v2049, 4
    %v2255 = vrot.slane %v2050, 4
    %v2256 = vrot.slane %v2051, 4
    %v2257 = vrot.slane %v2052, 4
    %v2258 = vsel %vm591, %v2254, %v2256
    %v2259 = vsel %vm591, %v2255, %v2257
    %v2260 = vsel %vm591, %v2252, %v2254
    %v2261 = vsel %vm591, %v2253, %v2255
    %v2262 = vsel %vm591, %v2250, %v2252
    %v2263 = vsel %vm591, %v2251, %v2253
    %v2264 = vsel %vm591, %v2256, %v2250
    %v2265 = vsel %vm591, %v2257, %v2251
    %s2266 = scalar_lea.vmem %s3, 320
    %v2267 = vld [vmem:[%s2266] sm:$0xff]
    %v2268 = vld [vmem:[%s2266 + $0x8] sm:$0xff]
    %v2269 = vld [vmem:[%s2266 + $0x10] sm:$0xff]
    %v2270 = vld [vmem:[%s2266 + $0x18] sm:$0xff]
    %v2271 = vld [vmem:[%s2266 + $0x20] sm:$0xff]
    %v2272 = vld [vmem:[%s2266 + $0x28] sm:$0xff]
    %v2273 = vld [vmem:[%s2266 + $0x30] sm:$0xff]
    %v2274 = vld [vmem:[%s2266 + $0x38] sm:$0xff]
    %v2275 = vld [vmem:[%s2266 + $0x40] sm:$0xff]
    %v2276 = vld [vmem:[%s2266 + $0x48] sm:$0xff]
    %v2277 = vld [vmem:[%s2266 + $0x50] sm:$0xff]
    %v2278 = vld [vmem:[%s2266 + $0x58] sm:$0xff]
    %v2279 = vld [vmem:[%s2266 + $0x60] sm:$0xff]
    %v2280 = vld [vmem:[%s2266 + $0x68] sm:$0xff]
    %v2281 = vld [vmem:[%s2266 + $0x70] sm:$0xff]
    %v2282 = vld [vmem:[%s2266 + $0x78] sm:$0xff]
    %v2283 = vld [vmem:[%s2266 + $0x80] sm:$0xff]
    %v2284 = vld [vmem:[%s2266 + $0x88] sm:$0xff]
    %v2285 = vld [vmem:[%s2266 + $0x90] sm:$0xff]
    %v2286 = vld [vmem:[%s2266 + $0x98] sm:$0xff]
    %v2288 = vsel %vm74, %v2263, 0
    %v2291 = vsel %vm74, %v2261, 0
    %v2294 = vsel %vm74, %v2259, 0
    %v2297 = vsel %vm74, %v2265, 0
    %2299 = vmatpush.msra.mxu0 %v2282
    %2300 = vmatpush.msra.mxu0 %v2281
    %2301 = vmatpush.msra.mxu0 %v2280
    %2302 = vmatpush.msra.mxu0 %v2279
    %2303 = vmatpush.msra.mxu0 %v2278
    %2304 = vmatpush.msra.mxu0 %v2277
    %2305 = vmatpush.msra.mxu0 %v2276
    %2306 = vmatpush.msra.mxu0 %v2275
    %2307 = vmatpush.msra.mxu0 %v2274
    %2308 = vmatpush.msra.mxu0 %v2273
    %2309 = vmatpush.msra.mxu0 %v2272
    %2310 = vmatpush.msra.mxu0 %v2271
    %2311 = vmatpush.msra.mxu0 %v2270
    %2312 = vmatpush.msra.mxu0 %v2269
    %2313 = vmatpush.msra.mxu0 %v2268
    %2314 = vmatpush.msra.mxu0 %v2267
    %2315 = vmatmul.f32.gmra.mxu0 %v2262
    %v2316 = vpop.f32.mrf.mxu0
    %v2317 = vadd.f32 0.0, %v2316
    %2318 = vmatmul.f32.gmra.mxu0 %v2260
    %v2319 = vpop.f32.mrf.mxu0
    %v2320 = vadd.f32 0.0, %v2319
    %2321 = vmatmul.f32.gmra.mxu0 %v2258
    %v2322 = vpop.f32.mrf.mxu0
    %v2323 = vadd.f32 0.0, %v2322
    %2324 = vmatmul.f32.gmra.mxu0 %v2264
    %v2325 = vpop.f32.mrf.mxu0
    %v2326 = vadd.f32 0.0, %v2325
    %2327 = vdwg.mxu0
    %2328 = vmatpush.msra.mxu0 0.0
    %2329 = vmatpush.msra.mxu0 0.0
    %2330 = vmatpush.msra.mxu0 0.0
    %2331 = vmatpush.msra.mxu0 0.0
    %2332 = vmatpush.msra.mxu0 0.0
    %2333 = vmatpush.msra.mxu0 0.0
    %2334 = vmatpush.msra.mxu0 0.0
    %2335 = vmatpush.msra.mxu0 0.0
    %2336 = vmatpush.msra.mxu0 0.0
    %2337 = vmatpush.msra.mxu0 0.0
    %2338 = vmatpush.msra.mxu0 0.0
    %2339 = vmatpush.msra.mxu0 0.0
    %2340 = vmatpush.msra.mxu0 %v2286
    %2341 = vmatpush.msra.mxu0 %v2285
    %2342 = vmatpush.msra.mxu0 %v2284
    %2343 = vmatpush.msra.mxu0 %v2283
    %2344 = vmatmul.f32.gmra.mxu0 %v2288
    %v2345 = vpop.f32.mrf.mxu0
    %v2346 = vadd.f32 %v2317, %v2345
    %2347 = vmatmul.f32.gmra.mxu0 %v2291
    %v2348 = vpop.f32.mrf.mxu0
    %v2349 = vadd.f32 %v2320, %v2348
    %2350 = vmatmul.f32.gmra.mxu0 %v2294
    %v2351 = vpop.f32.mrf.mxu0
    %v2352 = vadd.f32 %v2323, %v2351
    %2353 = vmatmul.f32.gmra.mxu0 %v2297
    %v2354 = vpop.f32.mrf.mxu0
    %v2355 = vadd.f32 %v2326, %v2354
    %2356 = vdwg.mxu0
    %v2357 = vadd.f32 %v2239, %v2346
    %v2358 = vadd.f32 %v2242, %v2349
    %v2359 = vadd.f32 %v2245, %v2352
    %v2360 = vadd.f32 %v2248, %v2355
    %v2361 = vrot.slane %v2045, 6
    %v2362 = vrot.slane %v2046, 6
    %v2363 = vrot.slane %v2047, 6
    %v2364 = vrot.slane %v2048, 6
    %v2365 = vrot.slane %v2049, 6
    %v2366 = vrot.slane %v2050, 6
    %v2367 = vrot.slane %v2051, 6
    %v2368 = vrot.slane %v2052, 6
    %vm2369 = vcmp.lt.s32.totalorder %v55, 2
    %v2370 = vsel %vm2369, %v2365, %v2367
    %v2371 = vsel %vm2369, %v2366, %v2368
    %v2372 = vsel %vm2369, %v2363, %v2365
    %v2373 = vsel %vm2369, %v2364, %v2366
    %v2374 = vsel %vm2369, %v2361, %v2363
    %v2375 = vsel %vm2369, %v2362, %v2364
    %v2376 = vsel %vm2369, %v2367, %v2361
    %v2377 = vsel %vm2369, %v2368, %v2362
    %s2378 = scalar_lea.vmem %s3, 480
    %v2379 = vld [vmem:[%s2378] sm:$0xff]
    %v2380 = vld [vmem:[%s2378 + $0x8] sm:$0xff]
    %v2381 = vld [vmem:[%s2378 + $0x10] sm:$0xff]
    %v2382 = vld [vmem:[%s2378 + $0x18] sm:$0xff]
    %v2383 = vld [vmem:[%s2378 + $0x20] sm:$0xff]
    %v2384 = vld [vmem:[%s2378 + $0x28] sm:$0xff]
    %v2385 = vld [vmem:[%s2378 + $0x30] sm:$0xff]
    %v2386 = vld [vmem:[%s2378 + $0x38] sm:$0xff]
    %v2387 = vld [vmem:[%s2378 + $0x40] sm:$0xff]
    %v2388 = vld [vmem:[%s2378 + $0x48] sm:$0xff]
    %v2389 = vld [vmem:[%s2378 + $0x50] sm:$0xff]
    %v2390 = vld [vmem:[%s2378 + $0x58] sm:$0xff]
    %v2391 = vld [vmem:[%s2378 + $0x60] sm:$0xff]
    %v2392 = vld [vmem:[%s2378 + $0x68] sm:$0xff]
    %v2393 = vld [vmem:[%s2378 + $0x70] sm:$0xff]
    %v2394 = vld [vmem:[%s2378 + $0x78] sm:$0xff]
    %v2395 = vld [vmem:[%s2378 + $0x80] sm:$0xff]
    %v2396 = vld [vmem:[%s2378 + $0x88] sm:$0xff]
    %v2397 = vld [vmem:[%s2378 + $0x90] sm:$0xff]
    %v2398 = vld [vmem:[%s2378 + $0x98] sm:$0xff]
    %v2400 = vsel %vm74, %v2375, 0
    %v2403 = vsel %vm74, %v2373, 0
    %v2406 = vsel %vm74, %v2371, 0
    %v2409 = vsel %vm74, %v2377, 0
    %2411 = vmatpush.msra.mxu0 %v2394
    %2412 = vmatpush.msra.mxu0 %v2393
    %2413 = vmatpush.msra.mxu0 %v2392
    %2414 = vmatpush.msra.mxu0 %v2391
    %2415 = vmatpush.msra.mxu0 %v2390
    %2416 = vmatpush.msra.mxu0 %v2389
    %2417 = vmatpush.msra.mxu0 %v2388
    %2418 = vmatpush.msra.mxu0 %v2387
    %2419 = vmatpush.msra.mxu0 %v2386
    %2420 = vmatpush.msra.mxu0 %v2385
    %2421 = vmatpush.msra.mxu0 %v2384
    %2422 = vmatpush.msra.mxu0 %v2383
    %2423 = vmatpush.msra.mxu0 %v2382
    %2424 = vmatpush.msra.mxu0 %v2381
    %2425 = vmatpush.msra.mxu0 %v2380
    %2426 = vmatpush.msra.mxu0 %v2379
    %2427 = vmatmul.f32.gmra.mxu0 %v2374
    %v2428 = vpop.f32.mrf.mxu0
    %v2429 = vadd.f32 0.0, %v2428
    %2430 = vmatmul.f32.gmra.mxu0 %v2372
    %v2431 = vpop.f32.mrf.mxu0
    %v2432 = vadd.f32 0.0, %v2431
    %2433 = vmatmul.f32.gmra.mxu0 %v2370
    %v2434 = vpop.f32.mrf.mxu0
    %v2435 = vadd.f32 0.0, %v2434
    %2436 = vmatmul.f32.gmra.mxu0 %v2376
    %v2437 = vpop.f32.mrf.mxu0
    %v2438 = vadd.f32 0.0, %v2437
    %2439 = vdwg.mxu0
    %2440 = vmatpush.msra.mxu0 0.0
    %2441 = vmatpush.msra.mxu0 0.0
    %2442 = vmatpush.msra.mxu0 0.0
    %2443 = vmatpush.msra.mxu0 0.0
    %2444 = vmatpush.msra.mxu0 0.0
    %2445 = vmatpush.msra.mxu0 0.0
    %2446 = vmatpush.msra.mxu0 0.0
    %2447 = vmatpush.msra.mxu0 0.0
    %2448 = vmatpush.msra.mxu0 0.0
    %2449 = vmatpush.msra.mxu0 0.0
    %2450 = vmatpush.msra.mxu0 0.0
    %2451 = vmatpush.msra.mxu0 0.0
    %2452 = vmatpush.msra.mxu0 %v2398
    %2453 = vmatpush.msra.mxu0 %v2397
    %2454 = vmatpush.msra.mxu0 %v2396
    %2455 = vmatpush.msra.mxu0 %v2395
    %2456 = vmatmul.f32.gmra.mxu0 %v2400
    %v2457 = vpop.f32.mrf.mxu0
    %v2458 = vadd.f32 %v2429, %v2457
    %2459 = vmatmul.f32.gmra.mxu0 %v2403
    %v2460 = vpop.f32.mrf.mxu0
    %v2461 = vadd.f32 %v2432, %v2460
    %2462 = vmatmul.f32.gmra.mxu0 %v2406
    %v2463 = vpop.f32.mrf.mxu0
    %v2464 = vadd.f32 %v2435, %v2463
    %2465 = vmatmul.f32.gmra.mxu0 %v2409
    %v2466 = vpop.f32.mrf.mxu0
    %v2467 = vadd.f32 %v2438, %v2466
    %2468 = vdwg.mxu0
    %v2469 = vadd.f32 %v2357, %v2458
    %v2470 = vadd.f32 %v2358, %v2461
    %v2471 = vadd.f32 %v2359, %v2464
    %v2472 = vadd.f32 %v2360, %v2467
    %s2473 = scalar_lea.vmem %s3, 640
    %v2474 = vld [vmem:[%s2473] sm:$0xff]
    %v2475 = vld [vmem:[%s2473 + $0x8] sm:$0xff]
    %v2476 = vld [vmem:[%s2473 + $0x10] sm:$0xff]
    %v2477 = vld [vmem:[%s2473 + $0x18] sm:$0xff]
    %v2478 = vld [vmem:[%s2473 + $0x20] sm:$0xff]
    %v2479 = vld [vmem:[%s2473 + $0x28] sm:$0xff]
    %v2480 = vld [vmem:[%s2473 + $0x30] sm:$0xff]
    %v2481 = vld [vmem:[%s2473 + $0x38] sm:$0xff]
    %v2482 = vld [vmem:[%s2473 + $0x40] sm:$0xff]
    %v2483 = vld [vmem:[%s2473 + $0x48] sm:$0xff]
    %v2484 = vld [vmem:[%s2473 + $0x50] sm:$0xff]
    %v2485 = vld [vmem:[%s2473 + $0x58] sm:$0xff]
    %v2486 = vld [vmem:[%s2473 + $0x60] sm:$0xff]
    %v2487 = vld [vmem:[%s2473 + $0x68] sm:$0xff]
    %v2488 = vld [vmem:[%s2473 + $0x70] sm:$0xff]
    %v2489 = vld [vmem:[%s2473 + $0x78] sm:$0xff]
    %v2490 = vld [vmem:[%s2473 + $0x80] sm:$0xff]
    %v2491 = vld [vmem:[%s2473 + $0x88] sm:$0xff]
    %v2492 = vld [vmem:[%s2473 + $0x90] sm:$0xff]
    %v2493 = vld [vmem:[%s2473 + $0x98] sm:$0xff]
    %2494 = vmatpush.msra.mxu0 %v2489
    %2495 = vmatpush.msra.mxu0 %v2488
    %2496 = vmatpush.msra.mxu0 %v2487
    %2497 = vmatpush.msra.mxu0 %v2486
    %2498 = vmatpush.msra.mxu0 %v2485
    %2499 = vmatpush.msra.mxu0 %v2484
    %2500 = vmatpush.msra.mxu0 %v2483
    %2501 = vmatpush.msra.mxu0 %v2482
    %2502 = vmatpush.msra.mxu0 %v2481
    %2503 = vmatpush.msra.mxu0 %v2480
    %2504 = vmatpush.msra.mxu0 %v2479
    %2505 = vmatpush.msra.mxu0 %v2478
    %2506 = vmatpush.msra.mxu0 %v2477
    %2507 = vmatpush.msra.mxu0 %v2476
    %2508 = vmatpush.msra.mxu0 %v2475
    %2509 = vmatpush.msra.mxu0 %v2474
    %2510 = vmatmul.f32.gmra.mxu0 %v2047
    %v2511 = vpop.f32.mrf.mxu0
    %v2512 = vadd.f32 0.0, %v2511
    %2513 = vmatmul.f32.gmra.mxu0 %v2049
    %v2514 = vpop.f32.mrf.mxu0
    %v2515 = vadd.f32 0.0, %v2514
    %2516 = vmatmul.f32.gmra.mxu0 %v2051
    %v2517 = vpop.f32.mrf.mxu0
    %v2518 = vadd.f32 0.0, %v2517
    %2519 = vmatmul.f32.gmra.mxu0 %v2045
    %v2520 = vpop.f32.mrf.mxu0
    %v2521 = vadd.f32 0.0, %v2520
    %2522 = vdwg.mxu0
    %2523 = vmatpush.msra.mxu0 0.0
    %2524 = vmatpush.msra.mxu0 0.0
    %2525 = vmatpush.msra.mxu0 0.0
    %2526 = vmatpush.msra.mxu0 0.0
    %2527 = vmatpush.msra.mxu0 0.0
    %2528 = vmatpush.msra.mxu0 0.0
    %2529 = vmatpush.msra.mxu0 0.0
    %2530 = vmatpush.msra.mxu0 0.0
    %2531 = vmatpush.msra.mxu0 0.0
    %2532 = vmatpush.msra.mxu0 0.0
    %2533 = vmatpush.msra.mxu0 0.0
    %2534 = vmatpush.msra.mxu0 0.0
    %2535 = vmatpush.msra.mxu0 %v2493
    %2536 = vmatpush.msra.mxu0 %v2492
    %2537 = vmatpush.msra.mxu0 %v2491
    %2538 = vmatpush.msra.mxu0 %v2490
    %2539 = vmatmul.f32.gmra.mxu0 %v2184
    %v2540 = vpop.f32.mrf.mxu0
    %v2541 = vadd.f32 %v2512, %v2540
    %2542 = vmatmul.f32.gmra.mxu0 %v2187
    %v2543 = vpop.f32.mrf.mxu0
    %v2544 = vadd.f32 %v2515, %v2543
    %2545 = vmatmul.f32.gmra.mxu0 %v2190
    %v2546 = vpop.f32.mrf.mxu0
    %v2547 = vadd.f32 %v2518, %v2546
    %2548 = vmatmul.f32.gmra.mxu0 %v2181
    %v2549 = vpop.f32.mrf.mxu0
    %v2550 = vadd.f32 %v2521, %v2549
    %2551 = vdwg.mxu0
    %v2552 = vadd.f32 %v2469, %v2541
    %v2553 = vadd.f32 %v2470, %v2544
    %v2554 = vadd.f32 %v2471, %v2547
    %v2555 = vadd.f32 %v2472, %v2550
    %v2556 = vld [vmem:[%s6 + $0x2] ss:$0 sm:$0xff]
    %v2557 = vadd.f32 %v2552, %v2556
    %v2558 = vadd.f32 %v2553, %v2556
    %v2559 = vadd.f32 %v2554, %v2556
    %v2560 = vadd.f32 %v2555, %v2556
    %v2561 = vmax.f32 %v2557, 0.0
    %v2562 = vmax.f32 %v2558, 0.0
    %v2563 = vmax.f32 %v2559, 0.0
    %v2564 = vmax.f32 %v2560, 0.0
    %v2565 = vld [vmem:[%s7] sm:$0xff]
    %v2566 = vld [vmem:[%s7 + $0x8] sm:$0xff]
    %v2567 = vld [vmem:[%s7 + $0x10] sm:$0xff]
    %v2568 = vld [vmem:[%s7 + $0x18] sm:$0xff]
    %v2569 = vld [vmem:[%s7 + $0x20] sm:$0xff]
    %v2570 = vld [vmem:[%s7 + $0x28] sm:$0xff]
    %v2571 = vld [vmem:[%s7 + $0x30] sm:$0xff]
    %v2572 = vld [vmem:[%s7 + $0x38] sm:$0xff]
    %v2573 = vld [vmem:[%s7 + $0x40] sm:$0xff]
    %v2574 = vld [vmem:[%s7 + $0x48] sm:$0xff]
    %v2575 = vld [vmem:[%s7 + $0x50] sm:$0xff]
    %v2576 = vld [vmem:[%s7 + $0x58] sm:$0xff]
    %v2577 = vld [vmem:[%s7 + $0x60] sm:$0xff]
    %v2578 = vld [vmem:[%s7 + $0x68] sm:$0xff]
    %v2579 = vld [vmem:[%s7 + $0x70] sm:$0xff]
    %v2580 = vld [vmem:[%s6 + $0x3] ss:$0 sm:$0xff]
    %vm2581 = vcmask 982016
    %v2583 = vsel %vm2581, %v2561, 0
    %v2586 = vsel %vm2581, %v2562, 0
    %v2589 = vsel %vm2581, %v2563, 0
    %v2592 = vsel %vm2581, %v2564, 0
    %2594 = vmatpush.msra.mxu0 0.0
    %2595 = vmatpush.msra.mxu0 %v2579
    %2596 = vmatpush.msra.mxu0 %v2578
    %2597 = vmatpush.msra.mxu0 %v2577
    %2598 = vmatpush.msra.mxu0 %v2576
    %2599 = vmatpush.msra.mxu0 %v2575
    %2600 = vmatpush.msra.mxu0 %v2574
    %2601 = vmatpush.msra.mxu0 %v2573
    %2602 = vmatpush.msra.mxu0 %v2572
    %2603 = vmatpush.msra.mxu0 %v2571
    %2604 = vmatpush.msra.mxu0 %v2570
    %2605 = vmatpush.msra.mxu0 %v2569
    %2606 = vmatpush.msra.mxu0 %v2568
    %2607 = vmatpush.msra.mxu0 %v2567
    %2608 = vmatpush.msra.mxu0 %v2566
    %2609 = vmatpush.msra.mxu0 %v2565
    %2610 = vmatmul.f32.gmra.mxu0 %v2583
    %v2611 = vpop.f32.mrf.mxu0
    %v2612 = vadd.f32 %v2580, %v2611
    %2613 = vmatmul.f32.gmra.mxu0 %v2586
    %v2614 = vpop.f32.mrf.mxu0
    %v2615 = vadd.f32 %v2580, %v2614
    %2616 = vmatmul.f32.gmra.mxu0 %v2589
    %v2617 = vpop.f32.mrf.mxu0
    %v2618 = vadd.f32 %v2580, %v2617
    %2619 = vmatmul.f32.gmra.mxu0 %v2592
    %v2620 = vpop.f32.mrf.mxu0
    %v2621 = vadd.f32 %v2580, %v2620
    %2622 = vdwg.mxu0
    %v2623 = vmax.f32 %v2612, 0.0
    %v2624 = vmax.f32 %v2615, 0.0
    %v2625 = vmax.f32 %v2618, 0.0
    %v2626 = vmax.f32 %v2621, 0.0
    %v2627 = vld [vmem:[%s7 + $0x78] sm:$0xff]
    %v2628 = vld [vmem:[%s7 + $0x80] sm:$0xff]
    %v2629 = vld [vmem:[%s7 + $0x88] sm:$0xff]
    %v2630 = vld [vmem:[%s7 + $0x90] sm:$0xff]
    %v2631 = vld [vmem:[%s7 + $0x98] sm:$0xff]
    %v2632 = vld [vmem:[%s7 + $0xa0] sm:$0xff]
    %v2633 = vld [vmem:[%s7 + $0xa8] sm:$0xff]
    %v2634 = vld [vmem:[%s7 + $0xb0] sm:$0xff]
    %v2635 = vld [vmem:[%s7 + $0xb8] sm:$0xff]
    %v2636 = vld [vmem:[%s7 + $0xc0] sm:$0xff]
    %v2637 = vld [vmem:[%s7 + $0xc8] sm:$0xf]
    %v2638 = vld [vmem:[%s6 + $0x4] ss:$0 sm:$0xff]
    %vm2639 = vcmask 687104
    %v2641 = vsel %vm2639, %v2623, 0
    %v2644 = vsel %vm2639, %v2624, 0
    %v2647 = vsel %vm2639, %v2625, 0
    %v2650 = vsel %vm2639, %v2626, 0
    %vm2652 = vcmask 1043456
    %v2654 = vsel %vm2652, %v2637, 0
    %2656 = vmatpush.msra.mxu0 0.0
    %2657 = vmatpush.msra.mxu0 0.0
    %2658 = vmatpush.msra.mxu0 0.0
    %2659 = vmatpush.msra.mxu0 0.0
    %2660 = vmatpush.msra.mxu0 0.0
    %2661 = vmatpush.msra.mxu0 %v2654
    %2662 = vmatpush.msra.mxu0 %v2636
    %2663 = vmatpush.msra.mxu0 %v2635
    %2664 = vmatpush.msra.mxu0 %v2634
    %2665 = vmatpush.msra.mxu0 %v2633
    %2666 = vmatpush.msra.mxu0 %v2632
    %2667 = vmatpush.msra.mxu0 %v2631
    %2668 = vmatpush.msra.mxu0 %v2630
    %2669 = vmatpush.msra.mxu0 %v2629
    %2670 = vmatpush.msra.mxu0 %v2628
    %2671 = vmatpush.msra.mxu0 %v2627
    %2672 = vmatmul.f32.gmra.mxu0 %v2641
    %v2673 = vpop.f32.mrf.mxu0
    %v2674 = vadd.f32 %v2638, %v2673
    %2675 = vmatmul.f32.gmra.mxu0 %v2644
    %v2676 = vpop.f32.mrf.mxu0
    %v2677 = vadd.f32 %v2638, %v2676
    %2678 = vmatmul.f32.gmra.mxu0 %v2647
    %v2679 = vpop.f32.mrf.mxu0
    %v2680 = vadd.f32 %v2638, %v2679
    %2681 = vmatmul.f32.gmra.mxu0 %v2650
    %v2682 = vpop.f32.mrf.mxu0
    %v2683 = vadd.f32 %v2638, %v2682
    %2684 = vdwg.mxu0
    %v2685 = vld [vmem:[%s5] sm:$0x3]
    %v2687 = vsel %vm74, %v2685, 0
    %2689 = vmatpush.msra.mxu0 0.0
    %2690 = vmatpush.msra.mxu0 0.0
    %2691 = vmatpush.msra.mxu0 0.0
    %2692 = vmatpush.msra.mxu0 0.0
    %2693 = vmatpush.msra.mxu0 0.0
    %2694 = vmatpush.msra.mxu0 0.0
    %2695 = vmatpush.msra.mxu0 0.0
    %2696 = vmatpush.msra.mxu0 0.0
    %2697 = vmatpush.msra.mxu0 0.0
    %2698 = vmatpush.msra.mxu0 0.0
    %2699 = vmatpush.msra.mxu0 0.0
    %2700 = vmatpush.msra.mxu0 0.0
    %2701 = vmatpush.msra.mxu0 %v2683
    %2702 = vmatpush.msra.mxu0 %v2680
    %2703 = vmatpush.msra.mxu0 %v2677
    %2704 = vmatpush.msra.mxu0 %v2674
    %2705 = vmatmul.f32.gmra.mxu0 %v2687
    %v2706 = vpop.f32.mrf.mxu0
    %v2707 = vadd.f32 0.0, %v2706
    %2708 = vdwg.mxu0
    %vm2709 = vcmask 74752
    %2710 = vst.msk [vmem:[#allocation2] sm:$0x3] %vm2709, %v2707
    // Predicated region
    $region34: #{lenet_forward.1} parent=1 // pred_check
      _
    $region35: #{lenet_forward.1} parent=1 // pred_check_branch
      %2712 = sbr.rel (0) target = $region37
    $region36: #{lenet_forward.1} parent=1 // pred_region
      %2714 = vsyncadd [#allocation3], 0
      %s2716 = sshll.u32 [#allocation2], 4
      %s2717 = int_to_ptr.vmem [resolvable:$true] %s2716
      %s2718 = sshll.u32 %s8, 4
      %s2719 = int_to_ptr.hbm [resolvable:$true] %s2718
      %2721 = dma.vmem_to_hbm [thread:$0]  %s2717, 32, %s2719, [#allocation3]
    $region37: #{lenet_forward.1} parent=1 // pred_fallthru
      _
    // Predicated region
    $region38: #{lenet_forward.1} parent=1 // pred_check
      _
    $region39: #{lenet_forward.1} parent=1 // pred_check_branch
      %2723 = sbr.rel (0) target = $region41
    $region40: #{lenet_forward.1} parent=1 // pred_region
      %2725 = dma.done [#allocation3], 32
    $region41: #{lenet_forward.1} parent=1 // pred_fallthru
      _
    %2726 = vsyncpa [#allocation3], 1

</llo_original>
